<compile_context>
chip_gen: v5e
topology: v5e:2x2
jax: 0.10.0
libtpu: 0.0.40
codegen_flags: <defaults>
</compile_context>

<pallas_src>
import math

import jax
import jax.numpy as jnp
from jax.experimental import pallas as pl
from jax.experimental.pallas import tpu as pltpu


def _tensor_intersection_kernel(wg_ref, e1_ref, e2_ref, out_ref, acc_ref):
    # wg_ref : [ck*D, D]  k-major rows of G (chunk c covers k in [c*ck, (c+1)*ck))
    # e1_ref : [ck, tb]   rows of embeds1 for this k chunk, batch tile on lanes
    # e2_ref : [D, tb]    full embeds2 batch tile (resident across k chunks)
    # out_ref: [D, tb]    lane-dense output tile (written on the last k chunk)
    # acc_ref: [D, tb]    f32 accumulator scratch
    c = pl.program_id(1)

    @pl.when(c == 0)
    def _init():
        acc_ref[...] = jnp.zeros_like(acc_ref)

    d = out_ref.shape[0]
    ck, tb = e1_ref.shape

    # One MXU matmul per (batch tile, k chunk): t[k*D + i, b] = sum_l G[i,k,l] * e2[l,b]
    t = jnp.dot(wg_ref[...], e2_ref[...], preferred_element_type=jnp.float32)

    # Pure-VPU epilogue: broadcast e1[k,b] over the i (sublane) axis, multiply,
    # then reduce over the LEADING k axis (vreg-aligned slab adds, no XLU).
    e1 = e1_ref[...].astype(jnp.float32)
    prod = t.reshape(ck, d, tb) * e1[:, None, :]
    acc_ref[...] += prod.sum(axis=0)

    @pl.when(c == pl.num_programs(1) - 1)
    def _finalize():
        out_ref[...] = acc_ref[...].astype(out_ref.dtype)


def _vmem_estimate(d, tb, ck, w_bytes, e_bytes, o_bytes):
    return (2 * ck * d * d * w_bytes      # weight chunk (double-buffered)
            + 2 * ck * tb * e_bytes       # e1 chunk     (double-buffered)
            + 2 * d * tb * e_bytes        # e2 tile      (double-buffered)
            + 2 * d * tb * o_bytes        # out tile     (double-buffered)
            + d * tb * 4                  # f32 accumulator scratch
            + 2 * ck * d * tb * 4)        # matmul result + product intermediates


def _choose_tiles(d, padded_b, w_bytes, e_bytes, o_bytes, budget_bytes):
    """Largest lane-dense batch tile and k-chunk fitting the VMEM budget."""
    tb_candidates = [t for t in (2048, 1024, 512, 256, 128)
                     if t <= padded_b and padded_b % t == 0]
    if not tb_candidates:
        tb_candidates = [padded_b]
    ck_candidates = sorted({c for c in range(8, d + 1, 8) if d % c == 0} | {d},
                           reverse=True)
    for tb in tb_candidates:
        for ck in ck_candidates:
            if _vmem_estimate(d, tb, ck, w_bytes, e_bytes, o_bytes) <= budget_bytes:
                return tb, ck
    return tb_candidates[-1], ck_candidates[-1]


def tensor_intersection_forward(wg, embeds1, embeds2, *,
                                batch_tile=None, k_chunk=None,
                                vmem_budget_bytes=40 * 1024 * 1024,
                                out_dtype=None):
    """wg: [D*D, D] k-major folded weight (see make_tensor_intersection_params);
    embeds1/2: [D, B] -> out [D, B]."""
    dd, d = wg.shape
    assert dd == d * d
    dim, batch = embeds1.shape
    assert dim == d and embeds2.shape == embeds1.shape

    orig_dtype = embeds1.dtype
    out_dtype = orig_dtype if out_dtype is None else out_dtype

    # Cast embeds to the (possibly bf16) weight dtype so the MXU sees matching
    # narrow operands; accumulation stays f32 inside the kernel.
    if embeds1.dtype != wg.dtype:
        embeds1 = embeds1.astype(wg.dtype)
        embeds2 = embeds2.astype(wg.dtype)

    # Pad B to a lane-dense multiple of 128: unmasked stores, bounded VMEM.
    padded_b = max(128, ((batch + 127) // 128) * 128)
    if padded_b != batch:
        pad = padded_b - batch
        embeds1 = jnp.pad(embeds1, ((0, 0), (0, pad)))
        embeds2 = jnp.pad(embeds2, ((0, 0), (0, pad)))

    w_bytes = jnp.dtype(wg.dtype).itemsize
    e_bytes = jnp.dtype(embeds1.dtype).itemsize
    o_bytes = jnp.dtype(out_dtype).itemsize
    tb_auto, ck_auto = _choose_tiles(d, padded_b, w_bytes, e_bytes, o_bytes,
                                     vmem_budget_bytes)
    tb = tb_auto if batch_tile is None else batch_tile
    ck = ck_auto if k_chunk is None else k_chunk
    assert padded_b % tb == 0 and (tb % 128 == 0 or tb == padded_b)
    assert d % ck == 0 and (ck % 8 == 0 or ck == d)

    grid = (padded_b // tb, d // ck)

    out = pl.pallas_call(
        _tensor_intersection_kernel,
        out_shape=jax.ShapeDtypeStruct((d, padded_b), out_dtype),
        grid_spec=pltpu.PrefetchScalarGridSpec(
            num_scalar_prefetch=0,
            grid=grid,
            in_specs=[
                # Weight rows for k chunk c; constant block (VMEM-resident,
                # no re-DMA) whenever there is a single k chunk.
                pl.BlockSpec((ck * d, d), lambda b, c: (c, 0)),
                pl.BlockSpec((ck, tb), lambda b, c: (c, b)),
                pl.BlockSpec((d, tb), lambda b, c: (0, b)),
            ],
            out_specs=pl.BlockSpec((d, tb), lambda b, c: (0, b)),
            scratch_shapes=[pltpu.VMEM((d, tb), jnp.float32)],
        ),
        compiler_params=pltpu.CompilerParams(
            # batch tiles independent (megacore-shardable on v7x); k is a reduction.
            dimension_semantics=("parallel", "arbitrary"),
            vmem_limit_bytes=48 * 1024 * 1024,
        ),
    )(wg, embeds1, embeds2)

    if padded_b != batch:
        out = out[:, :batch]
    return out


def make_tensor_intersection_params(dims, key, *, weight_dtype=jnp.float32):
    """Mirrors the module's __init__ (xavier-uniform [D,D,D] per mode) and does the
    one-time O(D^4) symmetric fold G[i,k,l] = sum_j T[i,j,k]*T[i,j,l], stored
    k-major so the in-kernel reduction is a pure VPU leading-axis add.
    Note: the fold assumes frozen weights (inference); differentiate it for training."""
    params = {}
    for mode in sorted(dims):
        d = dims[mode]
        key, sub = jax.random.split(key)
        fan_in = fan_out = d * d          # torch xavier_uniform fans for a [d,d,d] tensor
        bound = math.sqrt(6.0 / (fan_in + fan_out))
        w3d = jax.random.uniform(sub, (d, d, d), jnp.float32, -bound, bound)
        g = jnp.einsum('ijk,ijl->ikl', w3d, w3d,
                       precision=jax.lax.Precision.HIGHEST)
        wg = jnp.transpose(g, (1, 0, 2)).reshape(d * d, d).astype(weight_dtype)
        params[mode] = {"w3d": w3d, "wg": wg}
    return params


def _reference_forward(inter_tensor, embeds1, embeds2):
    """Plain-JAX reference mirroring the PyTorch forward."""
    d = inter_tensor.shape[0]
    hp = jax.lax.Precision.HIGHEST
    w = inter_tensor.reshape(d * d, d)
    b = embeds2.shape[1]
    t1 = jnp.dot(w, embeds1, precision=hp).reshape(d, d, b)
    t2 = jnp.dot(w, embeds2, precision=hp).reshape(d, d, b)
    return (t1 * t2).sum(axis=1)


if __name__ == "__main__":
    dims = {"a": 32, "b": 16}
    key = jax.random.PRNGKey(0)
    params = make_tensor_intersection_params(dims, key)

    # --- Mode "a": D=32, B=256 — auto tiles (single k chunk, one batch tile).
    key, k1, k2 = jax.random.split(key, 3)
    d, batch = dims["a"], 256
    e1 = jax.random.normal(k1, (d, batch), jnp.float32)
    e2 = jax.random.normal(k2, (d, batch), jnp.float32)
    ref = _reference_forward(params["a"]["w3d"], e1, e2)

    out = jax.block_until_ready(
        tensor_intersection_forward(params["a"]["wg"], e1, e2))
    assert out.shape == (d, batch) and out.dtype == jnp.float32
    assert jnp.allclose(out, ref, atol=1e-3, rtol=1e-3)

    # Forced small tiles: multi-step batch grid AND chunked k reduction
    # (exercises the pl.when accumulator init/finalize path).
    out_tiled = jax.block_until_ready(
        tensor_intersection_forward(params["a"]["wg"], e1, e2,
                                    batch_tile=128, k_chunk=8))
    assert jnp.allclose(out_tiled, ref, atol=1e-3, rtol=1e-3)

    # bf16 weight + embeds (fewer MXU passes, half the DMA bytes); f32 accumulation.
    wg_bf16 = params["a"]["wg"].astype(jnp.bfloat16)
    out_bf16 = jax.block_until_ready(
        tensor_intersection_forward(wg_bf16, e1, e2))
    assert out_bf16.dtype == jnp.float32
    assert jnp.allclose(out_bf16, ref, atol=5e-2, rtol=5e-2)

    # --- Mode "b": D=16, tiny ragged batch -> padded to one lane-dense 128 tile.
    key, k3, k4 = jax.random.split(key, 3)
    d, batch = dims["b"], 8
    e1b = jax.random.normal(k3, (d, batch), jnp.float32)
    e2b = jax.random.normal(k4, (d, batch), jnp.float32)
    out_b = jax.block_until_ready(
        tensor_intersection_forward(params["b"]["wg"], e1b, e2b))
    ref_b = _reference_forward(params["b"]["w3d"], e1b, e2b)
    assert out_b.shape == (d, batch)
    assert jnp.allclose(out_b, ref_b, atol=1e-3, rtol=1e-3)

    print("KERNEL_OK")
</pallas_src>

<mosaic_0001>
module attributes {stable_mosaic.version = 11 : i64} {
  func.func @_tensor_intersection_kernel(%arg0: i32, %arg1: i32, %arg2: memref<1024x32xf32, #tpu.memory_space<vmem>>, %arg3: memref<32x256xf32, #tpu.memory_space<vmem>>, %arg4: memref<32x256xf32, #tpu.memory_space<vmem>>, %arg5: memref<32x256xf32, #tpu.memory_space<vmem>>, %arg6: memref<32x256xf32, #tpu.memory_space<vmem>>) attributes {dimension_semantics = [#tpu.dimension_semantics<parallel>, #tpu.dimension_semantics<arbitrary>], iteration_bounds = array<i64: 1, 1>, scalar_prefetch = 0 : i64, scratch_operands = 1 : i64, tpu.core_type = #tpu.core_type<tc>, window_params = [{transform_indices = @transform_0, window_bounds = array<i64: 1024, 32>}, {transform_indices = @transform_1, window_bounds = array<i64: 32, 256>}, {transform_indices = @transform_2, window_bounds = array<i64: 32, 256>}, {transform_indices = @transform_3, window_bounds = array<i64: 32, 256>}]} {
    %c0_i32 = arith.constant 0 : i32
    %0 = arith.cmpi eq, %arg1, %c0_i32 : i32
    %1 = arith.extui %0 : i1 to i32
    %c0_i32_0 = arith.constant 0 : i32
    %2 = arith.cmpi ne, %1, %c0_i32_0 : i32
    scf.if %2 {
      %cst_13 = arith.constant 0.000000e+00 : f32
      %18 = vector.broadcast %cst_13 : f32 to vector<32x256xf32>
      %c0_14 = arith.constant 0 : index
      %c0_15 = arith.constant 0 : index
      %19 = vector.load %arg6[%c0_14, %c0_15] : memref<32x256xf32, #tpu.memory_space<vmem>>, vector<32x256xf32>
      tpu.vector_store %arg6[%c0_14, %c0_15], %18 {strides = array<i32>} : memref<32x256xf32, #tpu.memory_space<vmem>>, vector<32x256xf32>,
    } else {
    }
    %c0 = arith.constant 0 : index
    %c0_1 = arith.constant 0 : index
    %3 = vector.load %arg2[%c0, %c0_1] : memref<1024x32xf32, #tpu.memory_space<vmem>>, vector<1024x32xf32>
    %c0_2 = arith.constant 0 : index
    %c0_3 = arith.constant 0 : index
    %4 = vector.load %arg4[%c0_2, %c0_3] : memref<32x256xf32, #tpu.memory_space<vmem>>, vector<32x256xf32>
    %cst = arith.constant dense<0.000000e+00> : vector<1024x256xf32>
    %5 = tpu.matmul %3, %4, %cst {dimension_numbers = #tpu.dot_dimension_numbers<[1], [0], [0], [1], [0, 0, 1, 1], [], []>} : vector<1024x32xf32>, vector<32x256xf32>, vector<1024x256xf32> -> vector<1024x256xf32>
    %c0_4 = arith.constant 0 : index
    %c0_5 = arith.constant 0 : index
    %6 = vector.load %arg3[%c0_4, %c0_5] : memref<32x256xf32, #tpu.memory_space<vmem>>, vector<32x256xf32>
    %7 = vector.shape_cast %5 : vector<1024x256xf32> to vector<32x32x256xf32>
    %8 = vector.shape_cast %6 : vector<32x256xf32> to vector<32x1x256xf32>
    %9 = vector.broadcast %8 : vector<32x1x256xf32> to vector<32x32x256xf32>
    %10 = arith.mulf %7, %9 : vector<32x32x256xf32>
    %c0_6 = arith.constant 0 : index
    %c0_7 = arith.constant 0 : index
    %11 = vector.load %arg6[%c0_6, %c0_7] : memref<32x256xf32, #tpu.memory_space<vmem>>, vector<32x256xf32>
    %cst_8 = arith.constant dense<0.000000e+00> : vector<32x256xf32>
    %12 = vector.multi_reduction <add>, %10, %cst_8 [0] : vector<32x32x256xf32> to vector<32x256xf32>
    %13 = arith.addf %11, %12 : vector<32x256xf32>
    %c0_9 = arith.constant 0 : index
    %c0_10 = arith.constant 0 : index
    %14 = vector.load %arg6[%c0_9, %c0_10] : memref<32x256xf32, #tpu.memory_space<vmem>>, vector<32x256xf32>
    tpu.vector_store %arg6[%c0_9, %c0_10], %13 {strides = array<i32>} : memref<32x256xf32, #tpu.memory_space<vmem>>, vector<32x256xf32>,
    %c0_i32_11 = arith.constant 0 : i32
    %15 = arith.cmpi eq, %arg1, %c0_i32_11 : i32
    %16 = arith.extui %15 : i1 to i32
    %c0_i32_12 = arith.constant 0 : i32
    %17 = arith.cmpi ne, %16, %c0_i32_12 : i32
    scf.if %17 {
      %c0_13 = arith.constant 0 : index
      %c0_14 = arith.constant 0 : index
      %18 = vector.load %arg6[%c0_13, %c0_14] : memref<32x256xf32, #tpu.memory_space<vmem>>, vector<32x256xf32>
      %c0_15 = arith.constant 0 : index
      %c0_16 = arith.constant 0 : index
      %19 = vector.load %arg5[%c0_15, %c0_16] : memref<32x256xf32, #tpu.memory_space<vmem>>, vector<32x256xf32>
      tpu.vector_store %arg5[%c0_15, %c0_16], %18 {strides = array<i32>} : memref<32x256xf32, #tpu.memory_space<vmem>>, vector<32x256xf32>,
    } else {
    }
    return
  }
  func.func @transform_0(%arg0: i32, %arg1: i32) -> (i32, i32) {
    %c0_i32 = arith.constant 0 : i32
    %c0_i32_0 = arith.constant 0 : i32
    return %arg1, %c0_i32 : i32, i32
  }
  func.func @transform_1(%arg0: i32, %arg1: i32) -> (i32, i32) {
    %c0_i32 = arith.constant 0 : i32
    return %arg1, %arg0 : i32, i32
  }
  func.func @transform_2(%arg0: i32, %arg1: i32) -> (i32, i32) {
    %c0_i32 = arith.constant 0 : i32
    %c0_i32_0 = arith.constant 0 : i32
    return %c0_i32, %arg0 : i32, i32
  }
  func.func @transform_3(%arg0: i32, %arg1: i32) -> (i32, i32) {
    %c0_i32 = arith.constant 0 : i32
    %c0_i32_0 = arith.constant 0 : i32
    return %c0_i32, %arg0 : i32, i32
  }
}

</mosaic_0001>

<llo_original>
// kernel: tpu_custom_call.1
$region0: #{tpu_custom_call.1}
  #allocation0 [shape = 'u32[]', space=smem, size = 0x4, offset = 0x4, fixed_abs, tag = 'smem constant byte address 0x4 - core index']
  #allocation1 [shape = 'u32[72,128]{1,0:T(1,128)}', space=vmem, size = 0x9000, scoped, tag = 'internal scratch']
  #allocation2 [shape = 'f32[32,256]{1,0:T(8,128)}', space=vmem, size = 0x8000, scoped, tag = 'scratch operand']
  %s0 = inlined_call_operand.vmem [shape: f32[1024,32], index: 0, kind: input, shape index: {}]
  %s1 = inlined_call_operand.vmem [shape: f32[32,256], index: 1, kind: input, shape index: {}]
  %s2 = inlined_call_operand.vmem [shape: f32[32,256], index: 2, kind: input, shape index: {}]
  %s3 = inlined_call_operand.hbm [shape: f32[32,256], index: 3, kind: output, shape index: {}]
  %s4 = sld [smem:[#allocation0]]
  $region30: #{tpu_custom_call.1} parent=0
    _
  %s6 = ssub.s32 1, %s4
  %s7 = scalar_select 0, %s6, %s4
  $region1: #{tpu_custom_call.1} parent=0
    #allocation3 [shape = 'u8[32768]{0}', space=vmem, size = 0x8000, scoped, tag = 'output window, operand 0, single buffered']
    #allocation4 [shape = 's32[1]{0}', space=sflag, size = 0x4, scoped, tag = 'scoped memory for tpu_custom_call.1']
    %8 = vsyncpa [#allocation4], 0
    // Predicated region
    $region2: #{tpu_custom_call.1} parent=1 // pred_check
      _
    $region3: #{tpu_custom_call.1} parent=1 // pred_check_branch
      %10 = sbr.rel (0) target = $region5
    $region4: #{tpu_custom_call.1} parent=1 // pred_region
      _
    $region5: #{tpu_custom_call.1} parent=1 // pred_fallthru
      _
    // Predicated region
    $region6: #{tpu_custom_call.1} parent=1 // pred_check
      _
    $region7: #{tpu_custom_call.1} parent=1 // pred_check_branch
      %12 = sbr.rel (0) target = $region9
    $region8: #{tpu_custom_call.1} parent=1 // pred_region
      _
    $region9: #{tpu_custom_call.1} parent=1 // pred_fallthru
      _
    // Predicated region
    $region10: #{tpu_custom_call.1} parent=1 // pred_check
      _
    $region11: #{tpu_custom_call.1} parent=1 // pred_check_branch
      %14 = sbr.rel (0) target = $region13
    $region12: #{tpu_custom_call.1} parent=1 // pred_region
      _
    $region13: #{tpu_custom_call.1} parent=1 // pred_fallthru
      _
    %p15 = scmp.eq.s32.totalorder 0, 0
    // Predicated region
    $region14: #{tpu_custom_call.1} parent=1 // pred_check
      %p16 = pneg %p15
    $region15: #{tpu_custom_call.1} parent=1 // pred_check_branch
      %18 = sbr.rel (%p16) target = $region17
    $region16: #{tpu_custom_call.1} parent=1 // pred_region
      %19 = vst [vmem:[#allocation2] sm:$0xff] 0.0
      %20 = vst [vmem:[#allocation2 + $0x8] sm:$0xff] 0.0
      %21 = vst [vmem:[#allocation2 + $0x10] sm:$0xff] 0.0
      %22 = vst [vmem:[#allocation2 + $0x18] sm:$0xff] 0.0
      %23 = vst [vmem:[#allocation2 + $0x20] sm:$0xff] 0.0
      %24 = vst [vmem:[#allocation2 + $0x28] sm:$0xff] 0.0
      %25 = vst [vmem:[#allocation2 + $0x30] sm:$0xff] 0.0
      %26 = vst [vmem:[#allocation2 + $0x38] sm:$0xff] 0.0
    $region17: #{tpu_custom_call.1} parent=1 // pred_fallthru
      _
    %v27 = vld [vmem:[%s0] sm:$0xff]
    %v28 = vld [vmem:[%s0 + $0x8] sm:$0xff]
    %v29 = vld [vmem:[%s0 + $0x10] sm:$0xff]
    %v30 = vld [vmem:[%s0 + $0x18] sm:$0xff]
    %v31 = vld [vmem:[%s0 + $0x20] sm:$0xff]
    %v32 = vld [vmem:[%s0 + $0x28] sm:$0xff]
    %v33 = vld [vmem:[%s0 + $0x30] sm:$0xff]
    %v34 = vld [vmem:[%s0 + $0x38] sm:$0xff]
    %v35 = vld [vmem:[%s0 + $0x40] sm:$0xff]
    %v36 = vld [vmem:[%s0 + $0x48] sm:$0xff]
    %v37 = vld [vmem:[%s0 + $0x50] sm:$0xff]
    %v38 = vld [vmem:[%s0 + $0x58] sm:$0xff]
    %v39 = vld [vmem:[%s0 + $0x60] sm:$0xff]
    %v40 = vld [vmem:[%s0 + $0x68] sm:$0xff]
    %v41 = vld [vmem:[%s0 + $0x70] sm:$0xff]
    %v42 = vld [vmem:[%s0 + $0x78] sm:$0xff]
    %v43 = vld [vmem:[%s0 + $0x80] sm:$0xff]
    %v44 = vld [vmem:[%s0 + $0x88] sm:$0xff]
    %v45 = vld [vmem:[%s0 + $0x90] sm:$0xff]
    %v46 = vld [vmem:[%s0 + $0x98] sm:$0xff]
    %v47 = vld [vmem:[%s0 + $0xa0] sm:$0xff]
    %v48 = vld [vmem:[%s0 + $0xa8] sm:$0xff]
    %v49 = vld [vmem:[%s0 + $0xb0] sm:$0xff]
    %v50 = vld [vmem:[%s0 + $0xb8] sm:$0xff]
    %v51 = vld [vmem:[%s0 + $0xc0] sm:$0xff]
    %v52 = vld [vmem:[%s0 + $0xc8] sm:$0xff]
    %v53 = vld [vmem:[%s0 + $0xd0] sm:$0xff]
    %v54 = vld [vmem:[%s0 + $0xd8] sm:$0xff]
    %v55 = vld [vmem:[%s0 + $0xe0] sm:$0xff]
    %v56 = vld [vmem:[%s0 + $0xe8] sm:$0xff]
    %v57 = vld [vmem:[%s0 + $0xf0] sm:$0xff]
    %v58 = vld [vmem:[%s0 + $0xf8] sm:$0xff]
    %v59 = vld [vmem:[%s0 + $0x100] sm:$0xff]
    %v60 = vld [vmem:[%s0 + $0x108] sm:$0xff]
    %v61 = vld [vmem:[%s0 + $0x110] sm:$0xff]
    %v62 = vld [vmem:[%s0 + $0x118] sm:$0xff]
    %v63 = vld [vmem:[%s0 + $0x120] sm:$0xff]
    %v64 = vld [vmem:[%s0 + $0x128] sm:$0xff]
    %v65 = vld [vmem:[%s0 + $0x130] sm:$0xff]
    %v66 = vld [vmem:[%s0 + $0x138] sm:$0xff]
    %v67 = vld [vmem:[%s0 + $0x140] sm:$0xff]
    %v68 = vld [vmem:[%s0 + $0x148] sm:$0xff]
    %v69 = vld [vmem:[%s0 + $0x150] sm:$0xff]
    %v70 = vld [vmem:[%s0 + $0x158] sm:$0xff]
    %v71 = vld [vmem:[%s0 + $0x160] sm:$0xff]
    %v72 = vld [vmem:[%s0 + $0x168] sm:$0xff]
    %v73 = vld [vmem:[%s0 + $0x170] sm:$0xff]
    %v74 = vld [vmem:[%s0 + $0x178] sm:$0xff]
    %v75 = vld [vmem:[%s0 + $0x180] sm:$0xff]
    %v76 = vld [vmem:[%s0 + $0x188] sm:$0xff]
    %v77 = vld [vmem:[%s0 + $0x190] sm:$0xff]
    %v78 = vld [vmem:[%s0 + $0x198] sm:$0xff]
    %v79 = vld [vmem:[%s0 + $0x1a0] sm:$0xff]
    %v80 = vld [vmem:[%s0 + $0x1a8] sm:$0xff]
    %v81 = vld [vmem:[%s0 + $0x1b0] sm:$0xff]
    %v82 = vld [vmem:[%s0 + $0x1b8] sm:$0xff]
    %v83 = vld [vmem:[%s0 + $0x1c0] sm:$0xff]
    %v84 = vld [vmem:[%s0 + $0x1c8] sm:$0xff]
    %v85 = vld [vmem:[%s0 + $0x1d0] sm:$0xff]
    %v86 = vld [vmem:[%s0 + $0x1d8] sm:$0xff]
    %v87 = vld [vmem:[%s0 + $0x1e0] sm:$0xff]
    %v88 = vld [vmem:[%s0 + $0x1e8] sm:$0xff]
    %v89 = vld [vmem:[%s0 + $0x1f0] sm:$0xff]
    %v90 = vld [vmem:[%s0 + $0x1f8] sm:$0xff]
    %v91 = vld [vmem:[%s0 + $0x200] sm:$0xff]
    %v92 = vld [vmem:[%s0 + $0x208] sm:$0xff]
    %v93 = vld [vmem:[%s0 + $0x210] sm:$0xff]
    %v94 = vld [vmem:[%s0 + $0x218] sm:$0xff]
    %v95 = vld [vmem:[%s0 + $0x220] sm:$0xff]
    %v96 = vld [vmem:[%s0 + $0x228] sm:$0xff]
    %v97 = vld [vmem:[%s0 + $0x230] sm:$0xff]
    %v98 = vld [vmem:[%s0 + $0x238] sm:$0xff]
    %v99 = vld [vmem:[%s0 + $0x240] sm:$0xff]
    %v100 = vld [vmem:[%s0 + $0x248] sm:$0xff]
    %v101 = vld [vmem:[%s0 + $0x250] sm:$0xff]
    %v102 = vld [vmem:[%s0 + $0x258] sm:$0xff]
    %v103 = vld [vmem:[%s0 + $0x260] sm:$0xff]
    %v104 = vld [vmem:[%s0 + $0x268] sm:$0xff]
    %v105 = vld [vmem:[%s0 + $0x270] sm:$0xff]
    %v106 = vld [vmem:[%s0 + $0x278] sm:$0xff]
    %v107 = vld [vmem:[%s0 + $0x280] sm:$0xff]
    %v108 = vld [vmem:[%s0 + $0x288] sm:$0xff]
    %v109 = vld [vmem:[%s0 + $0x290] sm:$0xff]
    %v110 = vld [vmem:[%s0 + $0x298] sm:$0xff]
    %v111 = vld [vmem:[%s0 + $0x2a0] sm:$0xff]
    %v112 = vld [vmem:[%s0 + $0x2a8] sm:$0xff]
    %v113 = vld [vmem:[%s0 + $0x2b0] sm:$0xff]
    %v114 = vld [vmem:[%s0 + $0x2b8] sm:$0xff]
    %v115 = vld [vmem:[%s0 + $0x2c0] sm:$0xff]
    %v116 = vld [vmem:[%s0 + $0x2c8] sm:$0xff]
    %v117 = vld [vmem:[%s0 + $0x2d0] sm:$0xff]
    %v118 = vld [vmem:[%s0 + $0x2d8] sm:$0xff]
    %v119 = vld [vmem:[%s0 + $0x2e0] sm:$0xff]
    %v120 = vld [vmem:[%s0 + $0x2e8] sm:$0xff]
    %v121 = vld [vmem:[%s0 + $0x2f0] sm:$0xff]
    %v122 = vld [vmem:[%s0 + $0x2f8] sm:$0xff]
    %v123 = vld [vmem:[%s0 + $0x300] sm:$0xff]
    %v124 = vld [vmem:[%s0 + $0x308] sm:$0xff]
    %v125 = vld [vmem:[%s0 + $0x310] sm:$0xff]
    %v126 = vld [vmem:[%s0 + $0x318] sm:$0xff]
    %v127 = vld [vmem:[%s0 + $0x320] sm:$0xff]
    %v128 = vld [vmem:[%s0 + $0x328] sm:$0xff]
    %v129 = vld [vmem:[%s0 + $0x330] sm:$0xff]
    %v130 = vld [vmem:[%s0 + $0x338] sm:$0xff]
    %v131 = vld [vmem:[%s0 + $0x340] sm:$0xff]
    %v132 = vld [vmem:[%s0 + $0x348] sm:$0xff]
    %v133 = vld [vmem:[%s0 + $0x350] sm:$0xff]
    %v134 = vld [vmem:[%s0 + $0x358] sm:$0xff]
    %v135 = vld [vmem:[%s0 + $0x360] sm:$0xff]
    %v136 = vld [vmem:[%s0 + $0x368] sm:$0xff]
    %v137 = vld [vmem:[%s0 + $0x370] sm:$0xff]
    %v138 = vld [vmem:[%s0 + $0x378] sm:$0xff]
    %v139 = vld [vmem:[%s0 + $0x380] sm:$0xff]
    %v140 = vld [vmem:[%s0 + $0x388] sm:$0xff]
    %v141 = vld [vmem:[%s0 + $0x390] sm:$0xff]
    %v142 = vld [vmem:[%s0 + $0x398] sm:$0xff]
    %v143 = vld [vmem:[%s0 + $0x3a0] sm:$0xff]
    %v144 = vld [vmem:[%s0 + $0x3a8] sm:$0xff]
    %v145 = vld [vmem:[%s0 + $0x3b0] sm:$0xff]
    %v146 = vld [vmem:[%s0 + $0x3b8] sm:$0xff]
    %v147 = vld [vmem:[%s0 + $0x3c0] sm:$0xff]
    %v148 = vld [vmem:[%s0 + $0x3c8] sm:$0xff]
    %v149 = vld [vmem:[%s0 + $0x3d0] sm:$0xff]
    %v150 = vld [vmem:[%s0 + $0x3d8] sm:$0xff]
    %v151 = vld [vmem:[%s0 + $0x3e0] sm:$0xff]
    %v152 = vld [vmem:[%s0 + $0x3e8] sm:$0xff]
    %v153 = vld [vmem:[%s0 + $0x3f0] sm:$0xff]
    %v154 = vld [vmem:[%s0 + $0x3f8] sm:$0xff]
    %v155 = vld [vmem:[%s2] sm:$0xff]
    %v156 = vld [vmem:[%s2 + $0x8] sm:$0xff]
    %v157 = vld [vmem:[%s2 + $0x10] sm:$0xff]
    %v158 = vld [vmem:[%s2 + $0x18] sm:$0xff]
    %v159 = vld [vmem:[%s2 + $0x20] sm:$0xff]
    %v160 = vld [vmem:[%s2 + $0x28] sm:$0xff]
    %v161 = vld [vmem:[%s2 + $0x30] sm:$0xff]
    %v162 = vld [vmem:[%s2 + $0x38] sm:$0xff]
    %vm163 = vcmask 261120
    %v165 = vsel %vm163, %v27, 0
    %v168 = vsel %vm163, %v28, 0
    %v171 = vsel %vm163, %v29, 0
    %v174 = vsel %vm163, %v30, 0
    %v177 = vsel %vm163, %v31, 0
    %v180 = vsel %vm163, %v32, 0
    %v183 = vsel %vm163, %v33, 0
    %v186 = vsel %vm163, %v34, 0
    %v189 = vsel %vm163, %v35, 0
    %v192 = vsel %vm163, %v36, 0
    %v195 = vsel %vm163, %v37, 0
    %v198 = vsel %vm163, %v38, 0
    %v201 = vsel %vm163, %v39, 0
    %v204 = vsel %vm163, %v40, 0
    %v207 = vsel %vm163, %v41, 0
    %v210 = vsel %vm163, %v42, 0
    %v213 = vsel %vm163, %v43, 0
    %v216 = vsel %vm163, %v44, 0
    %v219 = vsel %vm163, %v45, 0
    %v222 = vsel %vm163, %v46, 0
    %v225 = vsel %vm163, %v47, 0
    %v228 = vsel %vm163, %v48, 0
    %v231 = vsel %vm163, %v49, 0
    %v234 = vsel %vm163, %v50, 0
    %v237 = vsel %vm163, %v51, 0
    %v240 = vsel %vm163, %v52, 0
    %v243 = vsel %vm163, %v53, 0
    %v246 = vsel %vm163, %v54, 0
    %v249 = vsel %vm163, %v55, 0
    %v252 = vsel %vm163, %v56, 0
    %v255 = vsel %vm163, %v57, 0
    %v258 = vsel %vm163, %v58, 0
    %v261 = vsel %vm163, %v59, 0
    %v264 = vsel %vm163, %v60, 0
    %v267 = vsel %vm163, %v61, 0
    %v270 = vsel %vm163, %v62, 0
    %v273 = vsel %vm163, %v63, 0
    %v276 = vsel %vm163, %v64, 0
    %v279 = vsel %vm163, %v65, 0
    %v282 = vsel %vm163, %v66, 0
    %v285 = vsel %vm163, %v67, 0
    %v288 = vsel %vm163, %v68, 0
    %v291 = vsel %vm163, %v69, 0
    %v294 = vsel %vm163, %v70, 0
    %v297 = vsel %vm163, %v71, 0
    %v300 = vsel %vm163, %v72, 0
    %v303 = vsel %vm163, %v73, 0
    %v306 = vsel %vm163, %v74, 0
    %v309 = vsel %vm163, %v75, 0
    %v312 = vsel %vm163, %v76, 0
    %v315 = vsel %vm163, %v77, 0
    %v318 = vsel %vm163, %v78, 0
    %v321 = vsel %vm163, %v79, 0
    %v324 = vsel %vm163, %v80, 0
    %v327 = vsel %vm163, %v81, 0
    %v330 = vsel %vm163, %v82, 0
    %v333 = vsel %vm163, %v83, 0
    %v336 = vsel %vm163, %v84, 0
    %v339 = vsel %vm163, %v85, 0
    %v342 = vsel %vm163, %v86, 0
    %v345 = vsel %vm163, %v87, 0
    %v348 = vsel %vm163, %v88, 0
    %v351 = vsel %vm163, %v89, 0
    %v354 = vsel %vm163, %v90, 0
    %v357 = vsel %vm163, %v91, 0
    %v360 = vsel %vm163, %v92, 0
    %v363 = vsel %vm163, %v93, 0
    %v366 = vsel %vm163, %v94, 0
    %v369 = vsel %vm163, %v95, 0
    %v372 = vsel %vm163, %v96, 0
    %v375 = vsel %vm163, %v97, 0
    %v378 = vsel %vm163, %v98, 0
    %v381 = vsel %vm163, %v99, 0
    %v384 = vsel %vm163, %v100, 0
    %v387 = vsel %vm163, %v101, 0
    %v390 = vsel %vm163, %v102, 0
    %v393 = vsel %vm163, %v103, 0
    %v396 = vsel %vm163, %v104, 0
    %v399 = vsel %vm163, %v105, 0
    %v402 = vsel %vm163, %v106, 0
    %v405 = vsel %vm163, %v107, 0
    %v408 = vsel %vm163, %v108, 0
    %v411 = vsel %vm163, %v109, 0
    %v414 = vsel %vm163, %v110, 0
    %v417 = vsel %vm163, %v111, 0
    %v420 = vsel %vm163, %v112, 0
    %v423 = vsel %vm163, %v113, 0
    %v426 = vsel %vm163, %v114, 0
    %v429 = vsel %vm163, %v115, 0
    %v432 = vsel %vm163, %v116, 0
    %v435 = vsel %vm163, %v117, 0
    %v438 = vsel %vm163, %v118, 0
    %v441 = vsel %vm163, %v119, 0
    %v444 = vsel %vm163, %v120, 0
    %v447 = vsel %vm163, %v121, 0
    %v450 = vsel %vm163, %v122, 0
    %v453 = vsel %vm163, %v123, 0
    %v456 = vsel %vm163, %v124, 0
    %v459 = vsel %vm163, %v125, 0
    %v462 = vsel %vm163, %v126, 0
    %v465 = vsel %vm163, %v127, 0
    %v468 = vsel %vm163, %v128, 0
    %v471 = vsel %vm163, %v129, 0
    %v474 = vsel %vm163, %v130, 0
    %v477 = vsel %vm163, %v131, 0
    %v480 = vsel %vm163, %v132, 0
    %v483 = vsel %vm163, %v133, 0
    %v486 = vsel %vm163, %v134, 0
    %v489 = vsel %vm163, %v135, 0
    %v492 = vsel %vm163, %v136, 0
    %v495 = vsel %vm163, %v137, 0
    %v498 = vsel %vm163, %v138, 0
    %v501 = vsel %vm163, %v139, 0
    %v504 = vsel %vm163, %v140, 0
    %v507 = vsel %vm163, %v141, 0
    %v510 = vsel %vm163, %v142, 0
    %v513 = vsel %vm163, %v143, 0
    %v516 = vsel %vm163, %v144, 0
    %v519 = vsel %vm163, %v145, 0
    %v522 = vsel %vm163, %v146, 0
    %v525 = vsel %vm163, %v147, 0
    %v528 = vsel %vm163, %v148, 0
    %v531 = vsel %vm163, %v149, 0
    %v534 = vsel %vm163, %v150, 0
    %v537 = vsel %vm163, %v151, 0
    %v540 = vsel %vm163, %v152, 0
    %v543 = vsel %vm163, %v153, 0
    %v546 = vsel %vm163, %v154, 0
    %548 = vmatpush.msra.mxu0 0.0
    %549 = vmatpush.msra.mxu0 0.0
    %550 = vmatpush.msra.mxu0 0.0
    %551 = vmatpush.msra.mxu0 0.0
    %552 = vmatpush.msra.mxu0 0.0
    %553 = vmatpush.msra.mxu0 0.0
    %554 = vmatpush.msra.mxu0 0.0
    %555 = vmatpush.msra.mxu0 0.0
    %556 = vmatpush.msra.mxu0 0.0
    %557 = vmatpush.msra.mxu0 0.0
    %558 = vmatpush.msra.mxu0 0.0
    %559 = vmatpush.msra.mxu0 0.0
    %560 = vmatpush.msra.mxu0 %v161
    %561 = vmatpush.msra.mxu0 %v159
    %562 = vmatpush.msra.mxu0 %v157
    %563 = vmatpush.msra.mxu0 %v155
    %564 = vmatmul.f32.gmra.mxu0 %v165
    %v565 = vpop.f32.mrf.mxu0
    %v566 = vadd.f32 0.0, %v565
    %567 = vmatmul.f32.gmra.mxu0 %v168
    %v568 = vpop.f32.mrf.mxu0
    %v569 = vadd.f32 0.0, %v568
    %570 = vmatmul.f32.gmra.mxu0 %v171
    %v571 = vpop.f32.mrf.mxu0
    %v572 = vadd.f32 0.0, %v571
    %573 = vmatmul.f32.gmra.mxu0 %v174
    %v574 = vpop.f32.mrf.mxu0
    %v575 = vadd.f32 0.0, %v574
    %576 = vmatmul.f32.gmra.mxu0 %v177
    %v577 = vpop.f32.mrf.mxu0
    %v578 = vadd.f32 0.0, %v577
    %579 = vmatmul.f32.gmra.mxu0 %v180
    %v580 = vpop.f32.mrf.mxu0
    %v581 = vadd.f32 0.0, %v580
    %582 = vmatmul.f32.gmra.mxu0 %v183
    %v583 = vpop.f32.mrf.mxu0
    %v584 = vadd.f32 0.0, %v583
    %585 = vmatmul.f32.gmra.mxu0 %v186
    %v586 = vpop.f32.mrf.mxu0
    %v587 = vadd.f32 0.0, %v586
    %588 = vmatmul.f32.gmra.mxu0 %v189
    %v589 = vpop.f32.mrf.mxu0
    %v590 = vadd.f32 0.0, %v589
    %591 = vmatmul.f32.gmra.mxu0 %v192
    %v592 = vpop.f32.mrf.mxu0
    %v593 = vadd.f32 0.0, %v592
    %594 = vmatmul.f32.gmra.mxu0 %v195
    %v595 = vpop.f32.mrf.mxu0
    %v596 = vadd.f32 0.0, %v595
    %597 = vmatmul.f32.gmra.mxu0 %v198
    %v598 = vpop.f32.mrf.mxu0
    %v599 = vadd.f32 0.0, %v598
    %600 = vmatmul.f32.gmra.mxu0 %v201
    %v601 = vpop.f32.mrf.mxu0
    %v602 = vadd.f32 0.0, %v601
    %603 = vmatmul.f32.gmra.mxu0 %v204
    %v604 = vpop.f32.mrf.mxu0
    %v605 = vadd.f32 0.0, %v604
    %606 = vmatmul.f32.gmra.mxu0 %v207
    %v607 = vpop.f32.mrf.mxu0
    %v608 = vadd.f32 0.0, %v607
    %609 = vmatmul.f32.gmra.mxu0 %v210
    %v610 = vpop.f32.mrf.mxu0
    %v611 = vadd.f32 0.0, %v610
    %612 = vmatmul.f32.gmra.mxu0 %v213
    %v613 = vpop.f32.mrf.mxu0
    %v614 = vadd.f32 0.0, %v613
    %615 = vmatmul.f32.gmra.mxu0 %v216
    %v616 = vpop.f32.mrf.mxu0
    %v617 = vadd.f32 0.0, %v616
    %618 = vmatmul.f32.gmra.mxu0 %v219
    %v619 = vpop.f32.mrf.mxu0
    %v620 = vadd.f32 0.0, %v619
    %621 = vmatmul.f32.gmra.mxu0 %v222
    %v622 = vpop.f32.mrf.mxu0
    %v623 = vadd.f32 0.0, %v622
    %624 = vmatmul.f32.gmra.mxu0 %v225
    %v625 = vpop.f32.mrf.mxu0
    %v626 = vadd.f32 0.0, %v625
    %627 = vmatmul.f32.gmra.mxu0 %v228
    %v628 = vpop.f32.mrf.mxu0
    %v629 = vadd.f32 0.0, %v628
    %630 = vmatmul.f32.gmra.mxu0 %v231
    %v631 = vpop.f32.mrf.mxu0
    %v632 = vadd.f32 0.0, %v631
    %633 = vmatmul.f32.gmra.mxu0 %v234
    %v634 = vpop.f32.mrf.mxu0
    %v635 = vadd.f32 0.0, %v634
    %636 = vmatmul.f32.gmra.mxu0 %v237
    %v637 = vpop.f32.mrf.mxu0
    %v638 = vadd.f32 0.0, %v637
    %639 = vmatmul.f32.gmra.mxu0 %v240
    %v640 = vpop.f32.mrf.mxu0
    %v641 = vadd.f32 0.0, %v640
    %642 = vmatmul.f32.gmra.mxu0 %v243
    %v643 = vpop.f32.mrf.mxu0
    %v644 = vadd.f32 0.0, %v643
    %645 = vmatmul.f32.gmra.mxu0 %v246
    %v646 = vpop.f32.mrf.mxu0
    %v647 = vadd.f32 0.0, %v646
    %648 = vmatmul.f32.gmra.mxu0 %v249
    %v649 = vpop.f32.mrf.mxu0
    %v650 = vadd.f32 0.0, %v649
    %651 = vmatmul.f32.gmra.mxu0 %v252
    %v652 = vpop.f32.mrf.mxu0
    %v653 = vadd.f32 0.0, %v652
    %654 = vmatmul.f32.gmra.mxu0 %v255
    %v655 = vpop.f32.mrf.mxu0
    %v656 = vadd.f32 0.0, %v655
    %657 = vmatmul.f32.gmra.mxu0 %v258
    %v658 = vpop.f32.mrf.mxu0
    %v659 = vadd.f32 0.0, %v658
    %660 = vmatmul.f32.gmra.mxu0 %v261
    %v661 = vpop.f32.mrf.mxu0
    %v662 = vadd.f32 0.0, %v661
    %663 = vmatmul.f32.gmra.mxu0 %v264
    %v664 = vpop.f32.mrf.mxu0
    %v665 = vadd.f32 0.0, %v664
    %666 = vmatmul.f32.gmra.mxu0 %v267
    %v667 = vpop.f32.mrf.mxu0
    %v668 = vadd.f32 0.0, %v667
    %669 = vmatmul.f32.gmra.mxu0 %v270
    %v670 = vpop.f32.mrf.mxu0
    %v671 = vadd.f32 0.0, %v670
    %672 = vmatmul.f32.gmra.mxu0 %v273
    %v673 = vpop.f32.mrf.mxu0
    %v674 = vadd.f32 0.0, %v673
    %675 = vmatmul.f32.gmra.mxu0 %v276
    %v676 = vpop.f32.mrf.mxu0
    %v677 = vadd.f32 0.0, %v676
    %678 = vmatmul.f32.gmra.mxu0 %v279
    %v679 = vpop.f32.mrf.mxu0
    %v680 = vadd.f32 0.0, %v679
    %681 = vmatmul.f32.gmra.mxu0 %v282
    %v682 = vpop.f32.mrf.mxu0
    %v683 = vadd.f32 0.0, %v682
    %684 = vmatmul.f32.gmra.mxu0 %v285
    %v685 = vpop.f32.mrf.mxu0
    %v686 = vadd.f32 0.0, %v685
    %687 = vmatmul.f32.gmra.mxu0 %v288
    %v688 = vpop.f32.mrf.mxu0
    %v689 = vadd.f32 0.0, %v688
    %690 = vmatmul.f32.gmra.mxu0 %v291
    %v691 = vpop.f32.mrf.mxu0
    %v692 = vadd.f32 0.0, %v691
    %693 = vmatmul.f32.gmra.mxu0 %v294
    %v694 = vpop.f32.mrf.mxu0
    %v695 = vadd.f32 0.0, %v694
    %696 = vmatmul.f32.gmra.mxu0 %v297
    %v697 = vpop.f32.mrf.mxu0
    %v698 = vadd.f32 0.0, %v697
    %699 = vmatmul.f32.gmra.mxu0 %v300
    %v700 = vpop.f32.mrf.mxu0
    %v701 = vadd.f32 0.0, %v700
    %702 = vmatmul.f32.gmra.mxu0 %v303
    %v703 = vpop.f32.mrf.mxu0
    %v704 = vadd.f32 0.0, %v703
    %705 = vmatmul.f32.gmra.mxu0 %v306
    %v706 = vpop.f32.mrf.mxu0
    %v707 = vadd.f32 0.0, %v706
    %708 = vmatmul.f32.gmra.mxu0 %v309
    %v709 = vpop.f32.mrf.mxu0
    %v710 = vadd.f32 0.0, %v709
    %711 = vmatmul.f32.gmra.mxu0 %v312
    %v712 = vpop.f32.mrf.mxu0
    %v713 = vadd.f32 0.0, %v712
    %714 = vmatmul.f32.gmra.mxu0 %v315
    %v715 = vpop.f32.mrf.mxu0
    %v716 = vadd.f32 0.0, %v715
    %717 = vmatmul.f32.gmra.mxu0 %v318
    %v718 = vpop.f32.mrf.mxu0
    %v719 = vadd.f32 0.0, %v718
    %720 = vmatmul.f32.gmra.mxu0 %v321
    %v721 = vpop.f32.mrf.mxu0
    %v722 = vadd.f32 0.0, %v721
    %723 = vmatmul.f32.gmra.mxu0 %v324
    %v724 = vpop.f32.mrf.mxu0
    %v725 = vadd.f32 0.0, %v724
    %726 = vmatmul.f32.gmra.mxu0 %v327
    %v727 = vpop.f32.mrf.mxu0
    %v728 = vadd.f32 0.0, %v727
    %729 = vmatmul.f32.gmra.mxu0 %v330
    %v730 = vpop.f32.mrf.mxu0
    %v731 = vadd.f32 0.0, %v730
    %732 = vmatmul.f32.gmra.mxu0 %v333
    %v733 = vpop.f32.mrf.mxu0
    %v734 = vadd.f32 0.0, %v733
    %735 = vmatmul.f32.gmra.mxu0 %v336
    %v736 = vpop.f32.mrf.mxu0
    %v737 = vadd.f32 0.0, %v736
    %738 = vmatmul.f32.gmra.mxu0 %v339
    %v739 = vpop.f32.mrf.mxu0
    %v740 = vadd.f32 0.0, %v739
    %741 = vmatmul.f32.gmra.mxu0 %v342
    %v742 = vpop.f32.mrf.mxu0
    %v743 = vadd.f32 0.0, %v742
    %744 = vmatmul.f32.gmra.mxu0 %v345
    %v745 = vpop.f32.mrf.mxu0
    %v746 = vadd.f32 0.0, %v745
    %747 = vmatmul.f32.gmra.mxu0 %v348
    %v748 = vpop.f32.mrf.mxu0
    %v749 = vadd.f32 0.0, %v748
    %750 = vmatmul.f32.gmra.mxu0 %v351
    %v751 = vpop.f32.mrf.mxu0
    %v752 = vadd.f32 0.0, %v751
    %753 = vmatmul.f32.gmra.mxu0 %v354
    %v754 = vpop.f32.mrf.mxu0
    %v755 = vadd.f32 0.0, %v754
    %756 = vmatmul.f32.gmra.mxu0 %v357
    %v757 = vpop.f32.mrf.mxu0
    %v758 = vadd.f32 0.0, %v757
    %759 = vmatmul.f32.gmra.mxu0 %v360
    %v760 = vpop.f32.mrf.mxu0
    %v761 = vadd.f32 0.0, %v760
    %762 = vmatmul.f32.gmra.mxu0 %v363
    %v763 = vpop.f32.mrf.mxu0
    %v764 = vadd.f32 0.0, %v763
    %765 = vmatmul.f32.gmra.mxu0 %v366
    %v766 = vpop.f32.mrf.mxu0
    %v767 = vadd.f32 0.0, %v766
    %768 = vmatmul.f32.gmra.mxu0 %v369
    %v769 = vpop.f32.mrf.mxu0
    %v770 = vadd.f32 0.0, %v769
    %771 = vmatmul.f32.gmra.mxu0 %v372
    %v772 = vpop.f32.mrf.mxu0
    %v773 = vadd.f32 0.0, %v772
    %774 = vmatmul.f32.gmra.mxu0 %v375
    %v775 = vpop.f32.mrf.mxu0
    %v776 = vadd.f32 0.0, %v775
    %777 = vmatmul.f32.gmra.mxu0 %v378
    %v778 = vpop.f32.mrf.mxu0
    %v779 = vadd.f32 0.0, %v778
    %780 = vmatmul.f32.gmra.mxu0 %v381
    %v781 = vpop.f32.mrf.mxu0
    %v782 = vadd.f32 0.0, %v781
    %783 = vmatmul.f32.gmra.mxu0 %v384
    %v784 = vpop.f32.mrf.mxu0
    %v785 = vadd.f32 0.0, %v784
    %786 = vmatmul.f32.gmra.mxu0 %v387
    %v787 = vpop.f32.mrf.mxu0
    %v788 = vadd.f32 0.0, %v787
    %789 = vmatmul.f32.gmra.mxu0 %v390
    %v790 = vpop.f32.mrf.mxu0
    %v791 = vadd.f32 0.0, %v790
    %792 = vmatmul.f32.gmra.mxu0 %v393
    %v793 = vpop.f32.mrf.mxu0
    %v794 = vadd.f32 0.0, %v793
    %795 = vmatmul.f32.gmra.mxu0 %v396
    %v796 = vpop.f32.mrf.mxu0
    %v797 = vadd.f32 0.0, %v796
    %798 = vmatmul.f32.gmra.mxu0 %v399
    %v799 = vpop.f32.mrf.mxu0
    %v800 = vadd.f32 0.0, %v799
    %801 = vmatmul.f32.gmra.mxu0 %v402
    %v802 = vpop.f32.mrf.mxu0
    %v803 = vadd.f32 0.0, %v802
    %804 = vmatmul.f32.gmra.mxu0 %v405
    %v805 = vpop.f32.mrf.mxu0
    %v806 = vadd.f32 0.0, %v805
    %807 = vmatmul.f32.gmra.mxu0 %v408
    %v808 = vpop.f32.mrf.mxu0
    %v809 = vadd.f32 0.0, %v808
    %810 = vmatmul.f32.gmra.mxu0 %v411
    %v811 = vpop.f32.mrf.mxu0
    %v812 = vadd.f32 0.0, %v811
    %813 = vmatmul.f32.gmra.mxu0 %v414
    %v814 = vpop.f32.mrf.mxu0
    %v815 = vadd.f32 0.0, %v814
    %816 = vmatmul.f32.gmra.mxu0 %v417
    %v817 = vpop.f32.mrf.mxu0
    %v818 = vadd.f32 0.0, %v817
    %819 = vmatmul.f32.gmra.mxu0 %v420
    %v820 = vpop.f32.mrf.mxu0
    %v821 = vadd.f32 0.0, %v820
    %822 = vmatmul.f32.gmra.mxu0 %v423
    %v823 = vpop.f32.mrf.mxu0
    %v824 = vadd.f32 0.0, %v823
    %825 = vmatmul.f32.gmra.mxu0 %v426
    %v826 = vpop.f32.mrf.mxu0
    %v827 = vadd.f32 0.0, %v826
    %828 = vmatmul.f32.gmra.mxu0 %v429
    %v829 = vpop.f32.mrf.mxu0
    %v830 = vadd.f32 0.0, %v829
    %831 = vmatmul.f32.gmra.mxu0 %v432
    %v832 = vpop.f32.mrf.mxu0
    %v833 = vadd.f32 0.0, %v832
    %834 = vmatmul.f32.gmra.mxu0 %v435
    %v835 = vpop.f32.mrf.mxu0
    %v836 = vadd.f32 0.0, %v835
    %837 = vmatmul.f32.gmra.mxu0 %v438
    %v838 = vpop.f32.mrf.mxu0
    %v839 = vadd.f32 0.0, %v838
    %840 = vmatmul.f32.gmra.mxu0 %v441
    %v841 = vpop.f32.mrf.mxu0
    %v842 = vadd.f32 0.0, %v841
    %843 = vmatmul.f32.gmra.mxu0 %v444
    %v844 = vpop.f32.mrf.mxu0
    %v845 = vadd.f32 0.0, %v844
    %846 = vmatmul.f32.gmra.mxu0 %v447
    %v847 = vpop.f32.mrf.mxu0
    %v848 = vadd.f32 0.0, %v847
    %849 = vmatmul.f32.gmra.mxu0 %v450
    %v850 = vpop.f32.mrf.mxu0
    %v851 = vadd.f32 0.0, %v850
    %852 = vmatmul.f32.gmra.mxu0 %v453
    %v853 = vpop.f32.mrf.mxu0
    %v854 = vadd.f32 0.0, %v853
    %855 = vmatmul.f32.gmra.mxu0 %v456
    %v856 = vpop.f32.mrf.mxu0
    %v857 = vadd.f32 0.0, %v856
    %858 = vmatmul.f32.gmra.mxu0 %v459
    %v859 = vpop.f32.mrf.mxu0
    %v860 = vadd.f32 0.0, %v859
    %861 = vmatmul.f32.gmra.mxu0 %v462
    %v862 = vpop.f32.mrf.mxu0
    %v863 = vadd.f32 0.0, %v862
    %864 = vmatmul.f32.gmra.mxu0 %v465
    %v865 = vpop.f32.mrf.mxu0
    %v866 = vadd.f32 0.0, %v865
    %867 = vmatmul.f32.gmra.mxu0 %v468
    %v868 = vpop.f32.mrf.mxu0
    %v869 = vadd.f32 0.0, %v868
    %870 = vmatmul.f32.gmra.mxu0 %v471
    %v871 = vpop.f32.mrf.mxu0
    %v872 = vadd.f32 0.0, %v871
    %873 = vmatmul.f32.gmra.mxu0 %v474
    %v874 = vpop.f32.mrf.mxu0
    %v875 = vadd.f32 0.0, %v874
    %876 = vmatmul.f32.gmra.mxu0 %v477
    %v877 = vpop.f32.mrf.mxu0
    %v878 = vadd.f32 0.0, %v877
    %879 = vmatmul.f32.gmra.mxu0 %v480
    %v880 = vpop.f32.mrf.mxu0
    %v881 = vadd.f32 0.0, %v880
    %882 = vmatmul.f32.gmra.mxu0 %v483
    %v883 = vpop.f32.mrf.mxu0
    %v884 = vadd.f32 0.0, %v883
    %885 = vmatmul.f32.gmra.mxu0 %v486
    %v886 = vpop.f32.mrf.mxu0
    %v887 = vadd.f32 0.0, %v886
    %888 = vmatmul.f32.gmra.mxu0 %v489
    %v889 = vpop.f32.mrf.mxu0
    %v890 = vadd.f32 0.0, %v889
    %891 = vmatmul.f32.gmra.mxu0 %v492
    %v892 = vpop.f32.mrf.mxu0
    %v893 = vadd.f32 0.0, %v892
    %894 = vmatmul.f32.gmra.mxu0 %v495
    %v895 = vpop.f32.mrf.mxu0
    %v896 = vadd.f32 0.0, %v895
    %897 = vmatmul.f32.gmra.mxu0 %v498
    %v898 = vpop.f32.mrf.mxu0
    %v899 = vadd.f32 0.0, %v898
    %900 = vmatmul.f32.gmra.mxu0 %v501
    %v901 = vpop.f32.mrf.mxu0
    %v902 = vadd.f32 0.0, %v901
    %903 = vmatmul.f32.gmra.mxu0 %v504
    %v904 = vpop.f32.mrf.mxu0
    %v905 = vadd.f32 0.0, %v904
    %906 = vmatmul.f32.gmra.mxu0 %v507
    %v907 = vpop.f32.mrf.mxu0
    %v908 = vadd.f32 0.0, %v907
    %909 = vmatmul.f32.gmra.mxu0 %v510
    %v910 = vpop.f32.mrf.mxu0
    %v911 = vadd.f32 0.0, %v910
    %912 = vmatmul.f32.gmra.mxu0 %v513
    %v913 = vpop.f32.mrf.mxu0
    %v914 = vadd.f32 0.0, %v913
    %915 = vmatmul.f32.gmra.mxu0 %v516
    %v916 = vpop.f32.mrf.mxu0
    %v917 = vadd.f32 0.0, %v916
    %918 = vmatmul.f32.gmra.mxu0 %v519
    %v919 = vpop.f32.mrf.mxu0
    %v920 = vadd.f32 0.0, %v919
    %921 = vmatmul.f32.gmra.mxu0 %v522
    %v922 = vpop.f32.mrf.mxu0
    %v923 = vadd.f32 0.0, %v922
    %924 = vmatmul.f32.gmra.mxu0 %v525
    %v925 = vpop.f32.mrf.mxu0
    %v926 = vadd.f32 0.0, %v925
    %927 = vmatmul.f32.gmra.mxu0 %v528
    %v928 = vpop.f32.mrf.mxu0
    %v929 = vadd.f32 0.0, %v928
    %930 = vmatmul.f32.gmra.mxu0 %v531
    %v931 = vpop.f32.mrf.mxu0
    %v932 = vadd.f32 0.0, %v931
    %933 = vmatmul.f32.gmra.mxu0 %v534
    %v934 = vpop.f32.mrf.mxu0
    %v935 = vadd.f32 0.0, %v934
    %936 = vmatmul.f32.gmra.mxu0 %v537
    %v937 = vpop.f32.mrf.mxu0
    %v938 = vadd.f32 0.0, %v937
    %939 = vmatmul.f32.gmra.mxu0 %v540
    %v940 = vpop.f32.mrf.mxu0
    %v941 = vadd.f32 0.0, %v940
    %942 = vmatmul.f32.gmra.mxu0 %v543
    %v943 = vpop.f32.mrf.mxu0
    %v944 = vadd.f32 0.0, %v943
    %945 = vmatmul.f32.gmra.mxu0 %v546
    %v946 = vpop.f32.mrf.mxu0
    %v947 = vadd.f32 0.0, %v946
    %948 = vdwg.mxu0
    %949 = vmatpush.msra.mxu0 0.0
    %950 = vmatpush.msra.mxu0 0.0
    %951 = vmatpush.msra.mxu0 0.0
    %952 = vmatpush.msra.mxu0 0.0
    %953 = vmatpush.msra.mxu0 0.0
    %954 = vmatpush.msra.mxu0 0.0
    %955 = vmatpush.msra.mxu0 0.0
    %956 = vmatpush.msra.mxu0 0.0
    %957 = vmatpush.msra.mxu0 0.0
    %958 = vmatpush.msra.mxu0 0.0
    %959 = vmatpush.msra.mxu0 0.0
    %960 = vmatpush.msra.mxu0 0.0
    %961 = vmatpush.msra.mxu0 %v162
    %962 = vmatpush.msra.mxu0 %v160
    %963 = vmatpush.msra.mxu0 %v158
    %964 = vmatpush.msra.mxu0 %v156
    %965 = vmatmul.f32.gmra.mxu0 %v165
    %v966 = vpop.f32.mrf.mxu0
    %v967 = vadd.f32 0.0, %v966
    %968 = vmatmul.f32.gmra.mxu0 %v168
    %v969 = vpop.f32.mrf.mxu0
    %v970 = vadd.f32 0.0, %v969
    %971 = vmatmul.f32.gmra.mxu0 %v171
    %v972 = vpop.f32.mrf.mxu0
    %v973 = vadd.f32 0.0, %v972
    %974 = vmatmul.f32.gmra.mxu0 %v174
    %v975 = vpop.f32.mrf.mxu0
    %v976 = vadd.f32 0.0, %v975
    %977 = vmatmul.f32.gmra.mxu0 %v177
    %v978 = vpop.f32.mrf.mxu0
    %v979 = vadd.f32 0.0, %v978
    %980 = vmatmul.f32.gmra.mxu0 %v180
    %v981 = vpop.f32.mrf.mxu0
    %v982 = vadd.f32 0.0, %v981
    %983 = vmatmul.f32.gmra.mxu0 %v183
    %v984 = vpop.f32.mrf.mxu0
    %v985 = vadd.f32 0.0, %v984
    %986 = vmatmul.f32.gmra.mxu0 %v186
    %v987 = vpop.f32.mrf.mxu0
    %v988 = vadd.f32 0.0, %v987
    %989 = vmatmul.f32.gmra.mxu0 %v189
    %v990 = vpop.f32.mrf.mxu0
    %v991 = vadd.f32 0.0, %v990
    %992 = vmatmul.f32.gmra.mxu0 %v192
    %v993 = vpop.f32.mrf.mxu0
    %v994 = vadd.f32 0.0, %v993
    %995 = vmatmul.f32.gmra.mxu0 %v195
    %v996 = vpop.f32.mrf.mxu0
    %v997 = vadd.f32 0.0, %v996
    %998 = vmatmul.f32.gmra.mxu0 %v198
    %v999 = vpop.f32.mrf.mxu0
    %v1000 = vadd.f32 0.0, %v999
    %1001 = vmatmul.f32.gmra.mxu0 %v201
    %v1002 = vpop.f32.mrf.mxu0
    %v1003 = vadd.f32 0.0, %v1002
    %1004 = vmatmul.f32.gmra.mxu0 %v204
    %v1005 = vpop.f32.mrf.mxu0
    %v1006 = vadd.f32 0.0, %v1005
    %1007 = vmatmul.f32.gmra.mxu0 %v207
    %v1008 = vpop.f32.mrf.mxu0
    %v1009 = vadd.f32 0.0, %v1008
    %1010 = vmatmul.f32.gmra.mxu0 %v210
    %v1011 = vpop.f32.mrf.mxu0
    %v1012 = vadd.f32 0.0, %v1011
    %1013 = vmatmul.f32.gmra.mxu0 %v213
    %v1014 = vpop.f32.mrf.mxu0
    %v1015 = vadd.f32 0.0, %v1014
    %1016 = vmatmul.f32.gmra.mxu0 %v216
    %v1017 = vpop.f32.mrf.mxu0
    %v1018 = vadd.f32 0.0, %v1017
    %1019 = vmatmul.f32.gmra.mxu0 %v219
    %v1020 = vpop.f32.mrf.mxu0
    %v1021 = vadd.f32 0.0, %v1020
    %1022 = vmatmul.f32.gmra.mxu0 %v222
    %v1023 = vpop.f32.mrf.mxu0
    %v1024 = vadd.f32 0.0, %v1023
    %1025 = vmatmul.f32.gmra.mxu0 %v225
    %v1026 = vpop.f32.mrf.mxu0
    %v1027 = vadd.f32 0.0, %v1026
    %1028 = vmatmul.f32.gmra.mxu0 %v228
    %v1029 = vpop.f32.mrf.mxu0
    %v1030 = vadd.f32 0.0, %v1029
    %1031 = vmatmul.f32.gmra.mxu0 %v231
    %v1032 = vpop.f32.mrf.mxu0
    %v1033 = vadd.f32 0.0, %v1032
    %1034 = vmatmul.f32.gmra.mxu0 %v234
    %v1035 = vpop.f32.mrf.mxu0
    %v1036 = vadd.f32 0.0, %v1035
    %1037 = vmatmul.f32.gmra.mxu0 %v237
    %v1038 = vpop.f32.mrf.mxu0
    %v1039 = vadd.f32 0.0, %v1038
    %1040 = vmatmul.f32.gmra.mxu0 %v240
    %v1041 = vpop.f32.mrf.mxu0
    %v1042 = vadd.f32 0.0, %v1041
    %1043 = vmatmul.f32.gmra.mxu0 %v243
    %v1044 = vpop.f32.mrf.mxu0
    %v1045 = vadd.f32 0.0, %v1044
    %1046 = vmatmul.f32.gmra.mxu0 %v246
    %v1047 = vpop.f32.mrf.mxu0
    %v1048 = vadd.f32 0.0, %v1047
    %1049 = vmatmul.f32.gmra.mxu0 %v249
    %v1050 = vpop.f32.mrf.mxu0
    %v1051 = vadd.f32 0.0, %v1050
    %1052 = vmatmul.f32.gmra.mxu0 %v252
    %v1053 = vpop.f32.mrf.mxu0
    %v1054 = vadd.f32 0.0, %v1053
    %1055 = vmatmul.f32.gmra.mxu0 %v255
    %v1056 = vpop.f32.mrf.mxu0
    %v1057 = vadd.f32 0.0, %v1056
    %1058 = vmatmul.f32.gmra.mxu0 %v258
    %v1059 = vpop.f32.mrf.mxu0
    %v1060 = vadd.f32 0.0, %v1059
    %1061 = vmatmul.f32.gmra.mxu0 %v261
    %v1062 = vpop.f32.mrf.mxu0
    %v1063 = vadd.f32 0.0, %v1062
    %1064 = vmatmul.f32.gmra.mxu0 %v264
    %v1065 = vpop.f32.mrf.mxu0
    %v1066 = vadd.f32 0.0, %v1065
    %1067 = vmatmul.f32.gmra.mxu0 %v267
    %v1068 = vpop.f32.mrf.mxu0
    %v1069 = vadd.f32 0.0, %v1068
    %1070 = vmatmul.f32.gmra.mxu0 %v270
    %v1071 = vpop.f32.mrf.mxu0
    %v1072 = vadd.f32 0.0, %v1071
    %1073 = vmatmul.f32.gmra.mxu0 %v273
    %v1074 = vpop.f32.mrf.mxu0
    %v1075 = vadd.f32 0.0, %v1074
    %1076 = vmatmul.f32.gmra.mxu0 %v276
    %v1077 = vpop.f32.mrf.mxu0
    %v1078 = vadd.f32 0.0, %v1077
    %1079 = vmatmul.f32.gmra.mxu0 %v279
    %v1080 = vpop.f32.mrf.mxu0
    %v1081 = vadd.f32 0.0, %v1080
    %1082 = vmatmul.f32.gmra.mxu0 %v282
    %v1083 = vpop.f32.mrf.mxu0
    %v1084 = vadd.f32 0.0, %v1083
    %1085 = vmatmul.f32.gmra.mxu0 %v285
    %v1086 = vpop.f32.mrf.mxu0
    %v1087 = vadd.f32 0.0, %v1086
    %1088 = vmatmul.f32.gmra.mxu0 %v288
    %v1089 = vpop.f32.mrf.mxu0
    %v1090 = vadd.f32 0.0, %v1089
    %1091 = vmatmul.f32.gmra.mxu0 %v291
    %v1092 = vpop.f32.mrf.mxu0
    %v1093 = vadd.f32 0.0, %v1092
    %1094 = vmatmul.f32.gmra.mxu0 %v294
    %v1095 = vpop.f32.mrf.mxu0
    %v1096 = vadd.f32 0.0, %v1095
    %1097 = vmatmul.f32.gmra.mxu0 %v297
    %v1098 = vpop.f32.mrf.mxu0
    %v1099 = vadd.f32 0.0, %v1098
    %1100 = vmatmul.f32.gmra.mxu0 %v300
    %v1101 = vpop.f32.mrf.mxu0
    %v1102 = vadd.f32 0.0, %v1101
    %1103 = vmatmul.f32.gmra.mxu0 %v303
    %v1104 = vpop.f32.mrf.mxu0
    %v1105 = vadd.f32 0.0, %v1104
    %1106 = vmatmul.f32.gmra.mxu0 %v306
    %v1107 = vpop.f32.mrf.mxu0
    %v1108 = vadd.f32 0.0, %v1107
    %1109 = vmatmul.f32.gmra.mxu0 %v309
    %v1110 = vpop.f32.mrf.mxu0
    %v1111 = vadd.f32 0.0, %v1110
    %1112 = vmatmul.f32.gmra.mxu0 %v312
    %v1113 = vpop.f32.mrf.mxu0
    %v1114 = vadd.f32 0.0, %v1113
    %1115 = vmatmul.f32.gmra.mxu0 %v315
    %v1116 = vpop.f32.mrf.mxu0
    %v1117 = vadd.f32 0.0, %v1116
    %1118 = vmatmul.f32.gmra.mxu0 %v318
    %v1119 = vpop.f32.mrf.mxu0
    %v1120 = vadd.f32 0.0, %v1119
    %1121 = vmatmul.f32.gmra.mxu0 %v321
    %v1122 = vpop.f32.mrf.mxu0
    %v1123 = vadd.f32 0.0, %v1122
    %1124 = vmatmul.f32.gmra.mxu0 %v324
    %v1125 = vpop.f32.mrf.mxu0
    %v1126 = vadd.f32 0.0, %v1125
    %1127 = vmatmul.f32.gmra.mxu0 %v327
    %v1128 = vpop.f32.mrf.mxu0
    %v1129 = vadd.f32 0.0, %v1128
    %1130 = vmatmul.f32.gmra.mxu0 %v330
    %v1131 = vpop.f32.mrf.mxu0
    %v1132 = vadd.f32 0.0, %v1131
    %1133 = vmatmul.f32.gmra.mxu0 %v333
    %v1134 = vpop.f32.mrf.mxu0
    %v1135 = vadd.f32 0.0, %v1134
    %1136 = vmatmul.f32.gmra.mxu0 %v336
    %v1137 = vpop.f32.mrf.mxu0
    %v1138 = vadd.f32 0.0, %v1137
    %1139 = vmatmul.f32.gmra.mxu0 %v339
    %v1140 = vpop.f32.mrf.mxu0
    %v1141 = vadd.f32 0.0, %v1140
    %1142 = vmatmul.f32.gmra.mxu0 %v342
    %v1143 = vpop.f32.mrf.mxu0
    %v1144 = vadd.f32 0.0, %v1143
    %1145 = vmatmul.f32.gmra.mxu0 %v345
    %v1146 = vpop.f32.mrf.mxu0
    %v1147 = vadd.f32 0.0, %v1146
    %1148 = vmatmul.f32.gmra.mxu0 %v348
    %v1149 = vpop.f32.mrf.mxu0
    %v1150 = vadd.f32 0.0, %v1149
    %1151 = vmatmul.f32.gmra.mxu0 %v351
    %v1152 = vpop.f32.mrf.mxu0
    %v1153 = vadd.f32 0.0, %v1152
    %1154 = vmatmul.f32.gmra.mxu0 %v354
    %v1155 = vpop.f32.mrf.mxu0
    %v1156 = vadd.f32 0.0, %v1155
    %1157 = vmatmul.f32.gmra.mxu0 %v357
    %v1158 = vpop.f32.mrf.mxu0
    %v1159 = vadd.f32 0.0, %v1158
    %1160 = vmatmul.f32.gmra.mxu0 %v360
    %v1161 = vpop.f32.mrf.mxu0
    %v1162 = vadd.f32 0.0, %v1161
    %1163 = vmatmul.f32.gmra.mxu0 %v363
    %v1164 = vpop.f32.mrf.mxu0
    %v1165 = vadd.f32 0.0, %v1164
    %1166 = vmatmul.f32.gmra.mxu0 %v366
    %v1167 = vpop.f32.mrf.mxu0
    %v1168 = vadd.f32 0.0, %v1167
    %1169 = vmatmul.f32.gmra.mxu0 %v369
    %v1170 = vpop.f32.mrf.mxu0
    %v1171 = vadd.f32 0.0, %v1170
    %1172 = vmatmul.f32.gmra.mxu0 %v372
    %v1173 = vpop.f32.mrf.mxu0
    %v1174 = vadd.f32 0.0, %v1173
    %1175 = vmatmul.f32.gmra.mxu0 %v375
    %v1176 = vpop.f32.mrf.mxu0
    %v1177 = vadd.f32 0.0, %v1176
    %1178 = vmatmul.f32.gmra.mxu0 %v378
    %v1179 = vpop.f32.mrf.mxu0
    %v1180 = vadd.f32 0.0, %v1179
    %1181 = vmatmul.f32.gmra.mxu0 %v381
    %v1182 = vpop.f32.mrf.mxu0
    %v1183 = vadd.f32 0.0, %v1182
    %1184 = vmatmul.f32.gmra.mxu0 %v384
    %v1185 = vpop.f32.mrf.mxu0
    %v1186 = vadd.f32 0.0, %v1185
    %1187 = vmatmul.f32.gmra.mxu0 %v387
    %v1188 = vpop.f32.mrf.mxu0
    %v1189 = vadd.f32 0.0, %v1188
    %1190 = vmatmul.f32.gmra.mxu0 %v390
    %v1191 = vpop.f32.mrf.mxu0
    %v1192 = vadd.f32 0.0, %v1191
    %1193 = vmatmul.f32.gmra.mxu0 %v393
    %v1194 = vpop.f32.mrf.mxu0
    %v1195 = vadd.f32 0.0, %v1194
    %1196 = vmatmul.f32.gmra.mxu0 %v396
    %v1197 = vpop.f32.mrf.mxu0
    %v1198 = vadd.f32 0.0, %v1197
    %1199 = vmatmul.f32.gmra.mxu0 %v399
    %v1200 = vpop.f32.mrf.mxu0
    %v1201 = vadd.f32 0.0, %v1200
    %1202 = vmatmul.f32.gmra.mxu0 %v402
    %v1203 = vpop.f32.mrf.mxu0
    %v1204 = vadd.f32 0.0, %v1203
    %1205 = vmatmul.f32.gmra.mxu0 %v405
    %v1206 = vpop.f32.mrf.mxu0
    %v1207 = vadd.f32 0.0, %v1206
    %1208 = vmatmul.f32.gmra.mxu0 %v408
    %v1209 = vpop.f32.mrf.mxu0
    %v1210 = vadd.f32 0.0, %v1209
    %1211 = vmatmul.f32.gmra.mxu0 %v411
    %v1212 = vpop.f32.mrf.mxu0
    %v1213 = vadd.f32 0.0, %v1212
    %1214 = vmatmul.f32.gmra.mxu0 %v414
    %v1215 = vpop.f32.mrf.mxu0
    %v1216 = vadd.f32 0.0, %v1215
    %1217 = vmatmul.f32.gmra.mxu0 %v417
    %v1218 = vpop.f32.mrf.mxu0
    %v1219 = vadd.f32 0.0, %v1218
    %1220 = vmatmul.f32.gmra.mxu0 %v420
    %v1221 = vpop.f32.mrf.mxu0
    %v1222 = vadd.f32 0.0, %v1221
    %1223 = vmatmul.f32.gmra.mxu0 %v423
    %v1224 = vpop.f32.mrf.mxu0
    %v1225 = vadd.f32 0.0, %v1224
    %1226 = vmatmul.f32.gmra.mxu0 %v426
    %v1227 = vpop.f32.mrf.mxu0
    %v1228 = vadd.f32 0.0, %v1227
    %1229 = vmatmul.f32.gmra.mxu0 %v429
    %v1230 = vpop.f32.mrf.mxu0
    %v1231 = vadd.f32 0.0, %v1230
    %1232 = vmatmul.f32.gmra.mxu0 %v432
    %v1233 = vpop.f32.mrf.mxu0
    %v1234 = vadd.f32 0.0, %v1233
    %1235 = vmatmul.f32.gmra.mxu0 %v435
    %v1236 = vpop.f32.mrf.mxu0
    %v1237 = vadd.f32 0.0, %v1236
    %1238 = vmatmul.f32.gmra.mxu0 %v438
    %v1239 = vpop.f32.mrf.mxu0
    %v1240 = vadd.f32 0.0, %v1239
    %1241 = vmatmul.f32.gmra.mxu0 %v441
    %v1242 = vpop.f32.mrf.mxu0
    %v1243 = vadd.f32 0.0, %v1242
    %1244 = vmatmul.f32.gmra.mxu0 %v444
    %v1245 = vpop.f32.mrf.mxu0
    %v1246 = vadd.f32 0.0, %v1245
    %1247 = vmatmul.f32.gmra.mxu0 %v447
    %v1248 = vpop.f32.mrf.mxu0
    %v1249 = vadd.f32 0.0, %v1248
    %1250 = vmatmul.f32.gmra.mxu0 %v450
    %v1251 = vpop.f32.mrf.mxu0
    %v1252 = vadd.f32 0.0, %v1251
    %1253 = vmatmul.f32.gmra.mxu0 %v453
    %v1254 = vpop.f32.mrf.mxu0
    %v1255 = vadd.f32 0.0, %v1254
    %1256 = vmatmul.f32.gmra.mxu0 %v456
    %v1257 = vpop.f32.mrf.mxu0
    %v1258 = vadd.f32 0.0, %v1257
    %1259 = vmatmul.f32.gmra.mxu0 %v459
    %v1260 = vpop.f32.mrf.mxu0
    %v1261 = vadd.f32 0.0, %v1260
    %1262 = vmatmul.f32.gmra.mxu0 %v462
    %v1263 = vpop.f32.mrf.mxu0
    %v1264 = vadd.f32 0.0, %v1263
    %1265 = vmatmul.f32.gmra.mxu0 %v465
    %v1266 = vpop.f32.mrf.mxu0
    %v1267 = vadd.f32 0.0, %v1266
    %1268 = vmatmul.f32.gmra.mxu0 %v468
    %v1269 = vpop.f32.mrf.mxu0
    %v1270 = vadd.f32 0.0, %v1269
    %1271 = vmatmul.f32.gmra.mxu0 %v471
    %v1272 = vpop.f32.mrf.mxu0
    %v1273 = vadd.f32 0.0, %v1272
    %1274 = vmatmul.f32.gmra.mxu0 %v474
    %v1275 = vpop.f32.mrf.mxu0
    %v1276 = vadd.f32 0.0, %v1275
    %1277 = vmatmul.f32.gmra.mxu0 %v477
    %v1278 = vpop.f32.mrf.mxu0
    %v1279 = vadd.f32 0.0, %v1278
    %1280 = vmatmul.f32.gmra.mxu0 %v480
    %v1281 = vpop.f32.mrf.mxu0
    %v1282 = vadd.f32 0.0, %v1281
    %1283 = vmatmul.f32.gmra.mxu0 %v483
    %v1284 = vpop.f32.mrf.mxu0
    %v1285 = vadd.f32 0.0, %v1284
    %1286 = vmatmul.f32.gmra.mxu0 %v486
    %v1287 = vpop.f32.mrf.mxu0
    %v1288 = vadd.f32 0.0, %v1287
    %1289 = vmatmul.f32.gmra.mxu0 %v489
    %v1290 = vpop.f32.mrf.mxu0
    %v1291 = vadd.f32 0.0, %v1290
    %1292 = vmatmul.f32.gmra.mxu0 %v492
    %v1293 = vpop.f32.mrf.mxu0
    %v1294 = vadd.f32 0.0, %v1293
    %1295 = vmatmul.f32.gmra.mxu0 %v495
    %v1296 = vpop.f32.mrf.mxu0
    %v1297 = vadd.f32 0.0, %v1296
    %1298 = vmatmul.f32.gmra.mxu0 %v498
    %v1299 = vpop.f32.mrf.mxu0
    %v1300 = vadd.f32 0.0, %v1299
    %1301 = vmatmul.f32.gmra.mxu0 %v501
    %v1302 = vpop.f32.mrf.mxu0
    %v1303 = vadd.f32 0.0, %v1302
    %1304 = vmatmul.f32.gmra.mxu0 %v504
    %v1305 = vpop.f32.mrf.mxu0
    %v1306 = vadd.f32 0.0, %v1305
    %1307 = vmatmul.f32.gmra.mxu0 %v507
    %v1308 = vpop.f32.mrf.mxu0
    %v1309 = vadd.f32 0.0, %v1308
    %1310 = vmatmul.f32.gmra.mxu0 %v510
    %v1311 = vpop.f32.mrf.mxu0
    %v1312 = vadd.f32 0.0, %v1311
    %1313 = vmatmul.f32.gmra.mxu0 %v513
    %v1314 = vpop.f32.mrf.mxu0
    %v1315 = vadd.f32 0.0, %v1314
    %1316 = vmatmul.f32.gmra.mxu0 %v516
    %v1317 = vpop.f32.mrf.mxu0
    %v1318 = vadd.f32 0.0, %v1317
    %1319 = vmatmul.f32.gmra.mxu0 %v519
    %v1320 = vpop.f32.mrf.mxu0
    %v1321 = vadd.f32 0.0, %v1320
    %1322 = vmatmul.f32.gmra.mxu0 %v522
    %v1323 = vpop.f32.mrf.mxu0
    %v1324 = vadd.f32 0.0, %v1323
    %1325 = vmatmul.f32.gmra.mxu0 %v525
    %v1326 = vpop.f32.mrf.mxu0
    %v1327 = vadd.f32 0.0, %v1326
    %1328 = vmatmul.f32.gmra.mxu0 %v528
    %v1329 = vpop.f32.mrf.mxu0
    %v1330 = vadd.f32 0.0, %v1329
    %1331 = vmatmul.f32.gmra.mxu0 %v531
    %v1332 = vpop.f32.mrf.mxu0
    %v1333 = vadd.f32 0.0, %v1332
    %1334 = vmatmul.f32.gmra.mxu0 %v534
    %v1335 = vpop.f32.mrf.mxu0
    %v1336 = vadd.f32 0.0, %v1335
    %1337 = vmatmul.f32.gmra.mxu0 %v537
    %v1338 = vpop.f32.mrf.mxu0
    %v1339 = vadd.f32 0.0, %v1338
    %1340 = vmatmul.f32.gmra.mxu0 %v540
    %v1341 = vpop.f32.mrf.mxu0
    %v1342 = vadd.f32 0.0, %v1341
    %1343 = vmatmul.f32.gmra.mxu0 %v543
    %v1344 = vpop.f32.mrf.mxu0
    %v1345 = vadd.f32 0.0, %v1344
    %1346 = vmatmul.f32.gmra.mxu0 %v546
    %v1347 = vpop.f32.mrf.mxu0
    %v1348 = vadd.f32 0.0, %v1347
    %1349 = vdwg.mxu0
    %v1350 = vld [vmem:[%s1] sm:$0xff]
    %v1351 = vld [vmem:[%s1 + $0x8] sm:$0xff]
    %v1352 = vld [vmem:[%s1 + $0x10] sm:$0xff]
    %v1353 = vld [vmem:[%s1 + $0x18] sm:$0xff]
    %v1354 = vld [vmem:[%s1 + $0x20] sm:$0xff]
    %v1355 = vld [vmem:[%s1 + $0x28] sm:$0xff]
    %v1356 = vld [vmem:[%s1 + $0x30] sm:$0xff]
    %v1357 = vld [vmem:[%s1 + $0x38] sm:$0xff]
    %v1366 = vrot.slane %v1351, 7
    %v1367 = vrot.slane %v1353, 7
    %v1368 = vrot.slane %v1355, 7
    %v1369 = vrot.slane %v1357, 7
    %vm1370 = vcmask 1040384
    %v1371 = vsel %vm1370, %v1350, %v1366
    %vm1372 = vcmask 1041409
    %v1373 = vsel %vm1372, %v1350, %v1366
    %v1374 = vrot.slane %v1373, 1
    %vm1375 = vcmask 1042434
    %v1376 = vsel %vm1375, %v1350, %v1366
    %v1377 = vrot.slane %v1376, 2
    %vm1378 = vcmask 1043459
    %v1379 = vsel %vm1378, %v1350, %v1366
    %v1380 = vrot.slane %v1379, 3
    %vm1381 = vcmask 1044484
    %v1382 = vsel %vm1381, %v1350, %v1366
    %v1383 = vrot.slane %v1382, 4
    %vm1384 = vcmask 1045509
    %v1385 = vsel %vm1384, %v1350, %v1366
    %v1386 = vrot.slane %v1385, 5
    %vm1387 = vcmask 1046534
    %v1388 = vsel %vm1387, %v1350, %v1366
    %v1389 = vrot.slane %v1388, 6
    %vm1390 = vcmask 1046528
    %v1391 = vsel %vm1390, %v1366, %v1350
    %v1392 = vrot.slane %v1391, 7
    %v1393 = vsel %vm1370, %v1352, %v1367
    %v1394 = vsel %vm1372, %v1352, %v1367
    %v1395 = vrot.slane %v1394, 1
    %v1396 = vsel %vm1375, %v1352, %v1367
    %v1397 = vrot.slane %v1396, 2
    %v1398 = vsel %vm1378, %v1352, %v1367
    %v1399 = vrot.slane %v1398, 3
    %v1400 = vsel %vm1381, %v1352, %v1367
    %v1401 = vrot.slane %v1400, 4
    %v1402 = vsel %vm1384, %v1352, %v1367
    %v1403 = vrot.slane %v1402, 5
    %v1404 = vsel %vm1387, %v1352, %v1367
    %v1405 = vrot.slane %v1404, 6
    %v1406 = vsel %vm1390, %v1367, %v1352
    %v1407 = vrot.slane %v1406, 7
    %v1408 = vsel %vm1370, %v1354, %v1368
    %v1409 = vsel %vm1372, %v1354, %v1368
    %v1410 = vrot.slane %v1409, 1
    %v1411 = vsel %vm1375, %v1354, %v1368
    %v1412 = vrot.slane %v1411, 2
    %v1413 = vsel %vm1378, %v1354, %v1368
    %v1414 = vrot.slane %v1413, 3
    %v1415 = vsel %vm1381, %v1354, %v1368
    %v1416 = vrot.slane %v1415, 4
    %v1417 = vsel %vm1384, %v1354, %v1368
    %v1418 = vrot.slane %v1417, 5
    %v1419 = vsel %vm1387, %v1354, %v1368
    %v1420 = vrot.slane %v1419, 6
    %v1421 = vsel %vm1390, %v1368, %v1354
    %v1422 = vrot.slane %v1421, 7
    %v1423 = vsel %vm1370, %v1356, %v1369
    %v1424 = vsel %vm1372, %v1356, %v1369
    %v1425 = vrot.slane %v1424, 1
    %v1426 = vsel %vm1375, %v1356, %v1369
    %v1427 = vrot.slane %v1426, 2
    %v1428 = vsel %vm1378, %v1356, %v1369
    %v1429 = vrot.slane %v1428, 3
    %v1430 = vsel %vm1381, %v1356, %v1369
    %v1431 = vrot.slane %v1430, 4
    %v1432 = vsel %vm1384, %v1356, %v1369
    %v1433 = vrot.slane %v1432, 5
    %v1434 = vsel %vm1387, %v1356, %v1369
    %v1435 = vrot.slane %v1434, 6
    %v1436 = vsel %vm1390, %v1369, %v1356
    %v1437 = vrot.slane %v1436, 7
    %v1438 = vperm.slane %v1371, 0
    %v1439 = vperm.slane %v1371, 1
    %v1440 = vperm.slane %v1374, 0
    %v1441 = vperm.slane %v1374, 1
    %v1442 = vperm.slane %v1377, 0
    %v1443 = vperm.slane %v1377, 1
    %v1444 = vperm.slane %v1380, 0
    %v1445 = vperm.slane %v1380, 1
    %v1446 = vperm.slane %v1383, 0
    %v1447 = vperm.slane %v1383, 1
    %v1448 = vperm.slane %v1386, 0
    %v1449 = vperm.slane %v1386, 1
    %v1450 = vperm.slane %v1389, 0
    %v1451 = vperm.slane %v1389, 1
    %v1452 = vperm.slane %v1392, 0
    %v1453 = vperm.slane %v1392, 1
    %v1454 = vperm.slane %v1393, 0
    %v1455 = vperm.slane %v1393, 1
    %v1456 = vperm.slane %v1395, 0
    %v1457 = vperm.slane %v1395, 1
    %v1458 = vperm.slane %v1397, 0
    %v1459 = vperm.slane %v1397, 1
    %v1460 = vperm.slane %v1399, 0
    %v1461 = vperm.slane %v1399, 1
    %v1462 = vperm.slane %v1401, 0
    %v1463 = vperm.slane %v1401, 1
    %v1464 = vperm.slane %v1403, 0
    %v1465 = vperm.slane %v1403, 1
    %v1466 = vperm.slane %v1405, 0
    %v1467 = vperm.slane %v1405, 1
    %v1468 = vperm.slane %v1407, 0
    %v1469 = vperm.slane %v1407, 1
    %v1470 = vperm.slane %v1408, 0
    %v1471 = vperm.slane %v1408, 1
    %v1472 = vperm.slane %v1410, 0
    %v1473 = vperm.slane %v1410, 1
    %v1474 = vperm.slane %v1412, 0
    %v1475 = vperm.slane %v1412, 1
    %v1476 = vperm.slane %v1414, 0
    %v1477 = vperm.slane %v1414, 1
    %v1478 = vperm.slane %v1416, 0
    %v1479 = vperm.slane %v1416, 1
    %v1480 = vperm.slane %v1418, 0
    %v1481 = vperm.slane %v1418, 1
    %v1482 = vperm.slane %v1420, 0
    %v1483 = vperm.slane %v1420, 1
    %v1484 = vperm.slane %v1422, 0
    %v1485 = vperm.slane %v1422, 1
    %v1486 = vperm.slane %v1423, 0
    %v1487 = vperm.slane %v1423, 1
    %v1488 = vperm.slane %v1425, 0
    %v1489 = vperm.slane %v1425, 1
    %v1490 = vperm.slane %v1427, 0
    %v1491 = vperm.slane %v1427, 1
    %v1492 = vperm.slane %v1429, 0
    %v1493 = vperm.slane %v1429, 1
    %v1494 = vperm.slane %v1431, 0
    %v1495 = vperm.slane %v1431, 1
    %v1496 = vperm.slane %v1433, 0
    %v1497 = vperm.slane %v1433, 1
    %v1498 = vperm.slane %v1435, 0
    %v1499 = vperm.slane %v1435, 1
    %v1500 = vperm.slane %v1437, 0
    %v1501 = vperm.slane %v1437, 1
    %v1566 = vmul.f32 %v566, %v1438
    %v1567 = vmul.f32 %v967, %v1439
    %v1568 = vmul.f32 %v569, %v1438
    %v1569 = vmul.f32 %v970, %v1439
    %v1570 = vmul.f32 %v572, %v1438
    %v1571 = vmul.f32 %v973, %v1439
    %v1572 = vmul.f32 %v575, %v1438
    %v1573 = vmul.f32 %v976, %v1439
    %v1574 = vmul.f32 %v578, %v1440
    %v1575 = vmul.f32 %v979, %v1441
    %v1576 = vmul.f32 %v581, %v1440
    %v1577 = vmul.f32 %v982, %v1441
    %v1578 = vmul.f32 %v584, %v1440
    %v1579 = vmul.f32 %v985, %v1441
    %v1580 = vmul.f32 %v587, %v1440
    %v1581 = vmul.f32 %v988, %v1441
    %v1582 = vmul.f32 %v590, %v1442
    %v1583 = vmul.f32 %v991, %v1443
    %v1584 = vmul.f32 %v593, %v1442
    %v1585 = vmul.f32 %v994, %v1443
    %v1586 = vmul.f32 %v596, %v1442
    %v1587 = vmul.f32 %v997, %v1443
    %v1588 = vmul.f32 %v599, %v1442
    %v1589 = vmul.f32 %v1000, %v1443
    %v1590 = vmul.f32 %v602, %v1444
    %v1591 = vmul.f32 %v1003, %v1445
    %v1592 = vmul.f32 %v605, %v1444
    %v1593 = vmul.f32 %v1006, %v1445
    %v1594 = vmul.f32 %v608, %v1444
    %v1595 = vmul.f32 %v1009, %v1445
    %v1596 = vmul.f32 %v611, %v1444
    %v1597 = vmul.f32 %v1012, %v1445
    %v1598 = vmul.f32 %v614, %v1446
    %v1599 = vmul.f32 %v1015, %v1447
    %v1600 = vmul.f32 %v617, %v1446
    %v1601 = vmul.f32 %v1018, %v1447
    %v1602 = vmul.f32 %v620, %v1446
    %v1603 = vmul.f32 %v1021, %v1447
    %v1604 = vmul.f32 %v623, %v1446
    %v1605 = vmul.f32 %v1024, %v1447
    %v1606 = vmul.f32 %v626, %v1448
    %v1607 = vmul.f32 %v1027, %v1449
    %v1608 = vmul.f32 %v629, %v1448
    %v1609 = vmul.f32 %v1030, %v1449
    %v1610 = vmul.f32 %v632, %v1448
    %v1611 = vmul.f32 %v1033, %v1449
    %v1612 = vmul.f32 %v635, %v1448
    %v1613 = vmul.f32 %v1036, %v1449
    %v1614 = vmul.f32 %v638, %v1450
    %v1615 = vmul.f32 %v1039, %v1451
    %v1616 = vmul.f32 %v641, %v1450
    %v1617 = vmul.f32 %v1042, %v1451
    %v1618 = vmul.f32 %v644, %v1450
    %v1619 = vmul.f32 %v1045, %v1451
    %v1620 = vmul.f32 %v647, %v1450
    %v1621 = vmul.f32 %v1048, %v1451
    %v1622 = vmul.f32 %v650, %v1452
    %v1623 = vmul.f32 %v1051, %v1453
    %v1624 = vmul.f32 %v653, %v1452
    %v1625 = vmul.f32 %v1054, %v1453
    %v1626 = vmul.f32 %v656, %v1452
    %v1627 = vmul.f32 %v1057, %v1453
    %v1628 = vmul.f32 %v659, %v1452
    %v1629 = vmul.f32 %v1060, %v1453
    %v1630 = vmul.f32 %v662, %v1454
    %v1631 = vmul.f32 %v1063, %v1455
    %v1632 = vmul.f32 %v665, %v1454
    %v1633 = vmul.f32 %v1066, %v1455
    %v1634 = vmul.f32 %v668, %v1454
    %v1635 = vmul.f32 %v1069, %v1455
    %v1636 = vmul.f32 %v671, %v1454
    %v1637 = vmul.f32 %v1072, %v1455
    %v1638 = vmul.f32 %v674, %v1456
    %v1639 = vmul.f32 %v1075, %v1457
    %v1640 = vmul.f32 %v677, %v1456
    %v1641 = vmul.f32 %v1078, %v1457
    %v1642 = vmul.f32 %v680, %v1456
    %v1643 = vmul.f32 %v1081, %v1457
    %v1644 = vmul.f32 %v683, %v1456
    %v1645 = vmul.f32 %v1084, %v1457
    %v1646 = vmul.f32 %v686, %v1458
    %v1647 = vmul.f32 %v1087, %v1459
    %v1648 = vmul.f32 %v689, %v1458
    %v1649 = vmul.f32 %v1090, %v1459
    %v1650 = vmul.f32 %v692, %v1458
    %v1651 = vmul.f32 %v1093, %v1459
    %v1652 = vmul.f32 %v695, %v1458
    %v1653 = vmul.f32 %v1096, %v1459
    %v1654 = vmul.f32 %v698, %v1460
    %v1655 = vmul.f32 %v1099, %v1461
    %v1656 = vmul.f32 %v701, %v1460
    %v1657 = vmul.f32 %v1102, %v1461
    %v1658 = vmul.f32 %v704, %v1460
    %v1659 = vmul.f32 %v1105, %v1461
    %v1660 = vmul.f32 %v707, %v1460
    %v1661 = vmul.f32 %v1108, %v1461
    %v1662 = vmul.f32 %v710, %v1462
    %v1663 = vmul.f32 %v1111, %v1463
    %v1664 = vmul.f32 %v713, %v1462
    %v1665 = vmul.f32 %v1114, %v1463
    %v1666 = vmul.f32 %v716, %v1462
    %v1667 = vmul.f32 %v1117, %v1463
    %v1668 = vmul.f32 %v719, %v1462
    %v1669 = vmul.f32 %v1120, %v1463
    %v1670 = vmul.f32 %v722, %v1464
    %v1671 = vmul.f32 %v1123, %v1465
    %v1672 = vmul.f32 %v725, %v1464
    %v1673 = vmul.f32 %v1126, %v1465
    %v1674 = vmul.f32 %v728, %v1464
    %v1675 = vmul.f32 %v1129, %v1465
    %v1676 = vmul.f32 %v731, %v1464
    %v1677 = vmul.f32 %v1132, %v1465
    %v1678 = vmul.f32 %v734, %v1466
    %v1679 = vmul.f32 %v1135, %v1467
    %v1680 = vmul.f32 %v737, %v1466
    %v1681 = vmul.f32 %v1138, %v1467
    %v1682 = vmul.f32 %v740, %v1466
    %v1683 = vmul.f32 %v1141, %v1467
    %v1684 = vmul.f32 %v743, %v1466
    %v1685 = vmul.f32 %v1144, %v1467
    %v1686 = vmul.f32 %v746, %v1468
    %v1687 = vmul.f32 %v1147, %v1469
    %v1688 = vmul.f32 %v749, %v1468
    %v1689 = vmul.f32 %v1150, %v1469
    %v1690 = vmul.f32 %v752, %v1468
    %v1691 = vmul.f32 %v1153, %v1469
    %v1692 = vmul.f32 %v755, %v1468
    %v1693 = vmul.f32 %v1156, %v1469
    %v1694 = vmul.f32 %v758, %v1470
    %v1695 = vmul.f32 %v1159, %v1471
    %v1696 = vmul.f32 %v761, %v1470
    %v1697 = vmul.f32 %v1162, %v1471
    %v1698 = vmul.f32 %v764, %v1470
    %v1699 = vmul.f32 %v1165, %v1471
    %v1700 = vmul.f32 %v767, %v1470
    %v1701 = vmul.f32 %v1168, %v1471
    %v1702 = vmul.f32 %v770, %v1472
    %v1703 = vmul.f32 %v1171, %v1473
    %v1704 = vmul.f32 %v773, %v1472
    %v1705 = vmul.f32 %v1174, %v1473
    %v1706 = vmul.f32 %v776, %v1472
    %v1707 = vmul.f32 %v1177, %v1473
    %v1708 = vmul.f32 %v779, %v1472
    %v1709 = vmul.f32 %v1180, %v1473
    %v1710 = vmul.f32 %v782, %v1474
    %v1711 = vmul.f32 %v1183, %v1475
    %v1712 = vmul.f32 %v785, %v1474
    %v1713 = vmul.f32 %v1186, %v1475
    %v1714 = vmul.f32 %v788, %v1474
    %v1715 = vmul.f32 %v1189, %v1475
    %v1716 = vmul.f32 %v791, %v1474
    %v1717 = vmul.f32 %v1192, %v1475
    %v1718 = vmul.f32 %v794, %v1476
    %v1719 = vmul.f32 %v1195, %v1477
    %v1720 = vmul.f32 %v797, %v1476
    %v1721 = vmul.f32 %v1198, %v1477
    %v1722 = vmul.f32 %v800, %v1476
    %v1723 = vmul.f32 %v1201, %v1477
    %v1724 = vmul.f32 %v803, %v1476
    %v1725 = vmul.f32 %v1204, %v1477
    %v1726 = vmul.f32 %v806, %v1478
    %v1727 = vmul.f32 %v1207, %v1479
    %v1728 = vmul.f32 %v809, %v1478
    %v1729 = vmul.f32 %v1210, %v1479
    %v1730 = vmul.f32 %v812, %v1478
    %v1731 = vmul.f32 %v1213, %v1479
    %v1732 = vmul.f32 %v815, %v1478
    %v1733 = vmul.f32 %v1216, %v1479
    %v1734 = vmul.f32 %v818, %v1480
    %v1735 = vmul.f32 %v1219, %v1481
    %v1736 = vmul.f32 %v821, %v1480
    %v1737 = vmul.f32 %v1222, %v1481
    %v1738 = vmul.f32 %v824, %v1480
    %v1739 = vmul.f32 %v1225, %v1481
    %v1740 = vmul.f32 %v827, %v1480
    %v1741 = vmul.f32 %v1228, %v1481
    %v1742 = vmul.f32 %v830, %v1482
    %v1743 = vmul.f32 %v1231, %v1483
    %v1744 = vmul.f32 %v833, %v1482
    %v1745 = vmul.f32 %v1234, %v1483
    %v1746 = vmul.f32 %v836, %v1482
    %v1747 = vmul.f32 %v1237, %v1483
    %v1748 = vmul.f32 %v839, %v1482
    %v1749 = vmul.f32 %v1240, %v1483
    %v1750 = vmul.f32 %v842, %v1484
    %v1751 = vmul.f32 %v1243, %v1485
    %v1752 = vmul.f32 %v845, %v1484
    %v1753 = vmul.f32 %v1246, %v1485
    %v1754 = vmul.f32 %v848, %v1484
    %v1755 = vmul.f32 %v1249, %v1485
    %v1756 = vmul.f32 %v851, %v1484
    %v1757 = vmul.f32 %v1252, %v1485
    %v1758 = vmul.f32 %v854, %v1486
    %v1759 = vmul.f32 %v1255, %v1487
    %v1760 = vmul.f32 %v857, %v1486
    %v1761 = vmul.f32 %v1258, %v1487
    %v1762 = vmul.f32 %v860, %v1486
    %v1763 = vmul.f32 %v1261, %v1487
    %v1764 = vmul.f32 %v863, %v1486
    %v1765 = vmul.f32 %v1264, %v1487
    %v1766 = vmul.f32 %v866, %v1488
    %v1767 = vmul.f32 %v1267, %v1489
    %v1768 = vmul.f32 %v869, %v1488
    %v1769 = vmul.f32 %v1270, %v1489
    %v1770 = vmul.f32 %v872, %v1488
    %v1771 = vmul.f32 %v1273, %v1489
    %v1772 = vmul.f32 %v875, %v1488
    %v1773 = vmul.f32 %v1276, %v1489
    %v1774 = vmul.f32 %v878, %v1490
    %v1775 = vmul.f32 %v1279, %v1491
    %v1776 = vmul.f32 %v881, %v1490
    %v1777 = vmul.f32 %v1282, %v1491
    %v1778 = vmul.f32 %v884, %v1490
    %v1779 = vmul.f32 %v1285, %v1491
    %v1780 = vmul.f32 %v887, %v1490
    %v1781 = vmul.f32 %v1288, %v1491
    %v1782 = vmul.f32 %v890, %v1492
    %v1783 = vmul.f32 %v1291, %v1493
    %v1784 = vmul.f32 %v893, %v1492
    %v1785 = vmul.f32 %v1294, %v1493
    %v1786 = vmul.f32 %v896, %v1492
    %v1787 = vmul.f32 %v1297, %v1493
    %v1788 = vmul.f32 %v899, %v1492
    %v1789 = vmul.f32 %v1300, %v1493
    %v1790 = vmul.f32 %v902, %v1494
    %v1791 = vmul.f32 %v1303, %v1495
    %v1792 = vmul.f32 %v905, %v1494
    %v1793 = vmul.f32 %v1306, %v1495
    %v1794 = vmul.f32 %v908, %v1494
    %v1795 = vmul.f32 %v1309, %v1495
    %v1796 = vmul.f32 %v911, %v1494
    %v1797 = vmul.f32 %v1312, %v1495
    %v1798 = vmul.f32 %v914, %v1496
    %v1799 = vmul.f32 %v1315, %v1497
    %v1800 = vmul.f32 %v917, %v1496
    %v1801 = vmul.f32 %v1318, %v1497
    %v1802 = vmul.f32 %v920, %v1496
    %v1803 = vmul.f32 %v1321, %v1497
    %v1804 = vmul.f32 %v923, %v1496
    %v1805 = vmul.f32 %v1324, %v1497
    %v1806 = vmul.f32 %v926, %v1498
    %v1807 = vmul.f32 %v1327, %v1499
    %v1808 = vmul.f32 %v929, %v1498
    %v1809 = vmul.f32 %v1330, %v1499
    %v1810 = vmul.f32 %v932, %v1498
    %v1811 = vmul.f32 %v1333, %v1499
    %v1812 = vmul.f32 %v935, %v1498
    %v1813 = vmul.f32 %v1336, %v1499
    %v1814 = vmul.f32 %v938, %v1500
    %v1815 = vmul.f32 %v1339, %v1501
    %v1816 = vmul.f32 %v941, %v1500
    %v1817 = vmul.f32 %v1342, %v1501
    %v1818 = vmul.f32 %v944, %v1500
    %v1819 = vmul.f32 %v1345, %v1501
    %v1820 = vmul.f32 %v947, %v1500
    %v1821 = vmul.f32 %v1348, %v1501
    %v1822 = vld [vmem:[#allocation2] sm:$0xff]
    %v1823 = vld [vmem:[#allocation2 + $0x8] sm:$0xff]
    %v1824 = vld [vmem:[#allocation2 + $0x10] sm:$0xff]
    %v1825 = vld [vmem:[#allocation2 + $0x18] sm:$0xff]
    %v1826 = vld [vmem:[#allocation2 + $0x20] sm:$0xff]
    %v1827 = vld [vmem:[#allocation2 + $0x28] sm:$0xff]
    %v1828 = vld [vmem:[#allocation2 + $0x30] sm:$0xff]
    %v1829 = vld [vmem:[#allocation2 + $0x38] sm:$0xff]
    %v1830 = vadd.f32 %v1566, %v1574
    %v1831 = vadd.f32 %v1830, %v1582
    %v1832 = vadd.f32 %v1831, %v1590
    %v1833 = vadd.f32 %v1832, %v1598
    %v1834 = vadd.f32 %v1833, %v1606
    %v1835 = vadd.f32 %v1834, %v1614
    %v1836 = vadd.f32 %v1835, %v1622
    %v1837 = vadd.f32 %v1836, %v1630
    %v1838 = vadd.f32 %v1837, %v1638
    %v1839 = vadd.f32 %v1838, %v1646
    %v1840 = vadd.f32 %v1839, %v1654
    %v1841 = vadd.f32 %v1840, %v1662
    %v1842 = vadd.f32 %v1841, %v1670
    %v1843 = vadd.f32 %v1842, %v1678
    %v1844 = vadd.f32 %v1843, %v1686
    %v1845 = vadd.f32 %v1844, %v1694
    %v1846 = vadd.f32 %v1845, %v1702
    %v1847 = vadd.f32 %v1846, %v1710
    %v1848 = vadd.f32 %v1847, %v1718
    %v1849 = vadd.f32 %v1848, %v1726
    %v1850 = vadd.f32 %v1849, %v1734
    %v1851 = vadd.f32 %v1850, %v1742
    %v1852 = vadd.f32 %v1851, %v1750
    %v1853 = vadd.f32 %v1852, %v1758
    %v1854 = vadd.f32 %v1853, %v1766
    %v1855 = vadd.f32 %v1854, %v1774
    %v1856 = vadd.f32 %v1855, %v1782
    %v1857 = vadd.f32 %v1856, %v1790
    %v1858 = vadd.f32 %v1857, %v1798
    %v1859 = vadd.f32 %v1858, %v1806
    %v1860 = vadd.f32 %v1859, %v1814
    %v1861 = vadd.f32 %v1567, %v1575
    %v1862 = vadd.f32 %v1861, %v1583
    %v1863 = vadd.f32 %v1862, %v1591
    %v1864 = vadd.f32 %v1863, %v1599
    %v1865 = vadd.f32 %v1864, %v1607
    %v1866 = vadd.f32 %v1865, %v1615
    %v1867 = vadd.f32 %v1866, %v1623
    %v1868 = vadd.f32 %v1867, %v1631
    %v1869 = vadd.f32 %v1868, %v1639
    %v1870 = vadd.f32 %v1869, %v1647
    %v1871 = vadd.f32 %v1870, %v1655
    %v1872 = vadd.f32 %v1871, %v1663
    %v1873 = vadd.f32 %v1872, %v1671
    %v1874 = vadd.f32 %v1873, %v1679
    %v1875 = vadd.f32 %v1874, %v1687
    %v1876 = vadd.f32 %v1875, %v1695
    %v1877 = vadd.f32 %v1876, %v1703
    %v1878 = vadd.f32 %v1877, %v1711
    %v1879 = vadd.f32 %v1878, %v1719
    %v1880 = vadd.f32 %v1879, %v1727
    %v1881 = vadd.f32 %v1880, %v1735
    %v1882 = vadd.f32 %v1881, %v1743
    %v1883 = vadd.f32 %v1882, %v1751
    %v1884 = vadd.f32 %v1883, %v1759
    %v1885 = vadd.f32 %v1884, %v1767
    %v1886 = vadd.f32 %v1885, %v1775
    %v1887 = vadd.f32 %v1886, %v1783
    %v1888 = vadd.f32 %v1887, %v1791
    %v1889 = vadd.f32 %v1888, %v1799
    %v1890 = vadd.f32 %v1889, %v1807
    %v1891 = vadd.f32 %v1890, %v1815
    %v1892 = vadd.f32 %v1568, %v1576
    %v1893 = vadd.f32 %v1892, %v1584
    %v1894 = vadd.f32 %v1893, %v1592
    %v1895 = vadd.f32 %v1894, %v1600
    %v1896 = vadd.f32 %v1895, %v1608
    %v1897 = vadd.f32 %v1896, %v1616
    %v1898 = vadd.f32 %v1897, %v1624
    %v1899 = vadd.f32 %v1898, %v1632
    %v1900 = vadd.f32 %v1899, %v1640
    %v1901 = vadd.f32 %v1900, %v1648
    %v1902 = vadd.f32 %v1901, %v1656
    %v1903 = vadd.f32 %v1902, %v1664
    %v1904 = vadd.f32 %v1903, %v1672
    %v1905 = vadd.f32 %v1904, %v1680
    %v1906 = vadd.f32 %v1905, %v1688
    %v1907 = vadd.f32 %v1906, %v1696
    %v1908 = vadd.f32 %v1907, %v1704
    %v1909 = vadd.f32 %v1908, %v1712
    %v1910 = vadd.f32 %v1909, %v1720
    %v1911 = vadd.f32 %v1910, %v1728
    %v1912 = vadd.f32 %v1911, %v1736
    %v1913 = vadd.f32 %v1912, %v1744
    %v1914 = vadd.f32 %v1913, %v1752
    %v1915 = vadd.f32 %v1914, %v1760
    %v1916 = vadd.f32 %v1915, %v1768
    %v1917 = vadd.f32 %v1916, %v1776
    %v1918 = vadd.f32 %v1917, %v1784
    %v1919 = vadd.f32 %v1918, %v1792
    %v1920 = vadd.f32 %v1919, %v1800
    %v1921 = vadd.f32 %v1920, %v1808
    %v1922 = vadd.f32 %v1921, %v1816
    %v1923 = vadd.f32 %v1569, %v1577
    %v1924 = vadd.f32 %v1923, %v1585
    %v1925 = vadd.f32 %v1924, %v1593
    %v1926 = vadd.f32 %v1925, %v1601
    %v1927 = vadd.f32 %v1926, %v1609
    %v1928 = vadd.f32 %v1927, %v1617
    %v1929 = vadd.f32 %v1928, %v1625
    %v1930 = vadd.f32 %v1929, %v1633
    %v1931 = vadd.f32 %v1930, %v1641
    %v1932 = vadd.f32 %v1931, %v1649
    %v1933 = vadd.f32 %v1932, %v1657
    %v1934 = vadd.f32 %v1933, %v1665
    %v1935 = vadd.f32 %v1934, %v1673
    %v1936 = vadd.f32 %v1935, %v1681
    %v1937 = vadd.f32 %v1936, %v1689
    %v1938 = vadd.f32 %v1937, %v1697
    %v1939 = vadd.f32 %v1938, %v1705
    %v1940 = vadd.f32 %v1939, %v1713
    %v1941 = vadd.f32 %v1940, %v1721
    %v1942 = vadd.f32 %v1941, %v1729
    %v1943 = vadd.f32 %v1942, %v1737
    %v1944 = vadd.f32 %v1943, %v1745
    %v1945 = vadd.f32 %v1944, %v1753
    %v1946 = vadd.f32 %v1945, %v1761
    %v1947 = vadd.f32 %v1946, %v1769
    %v1948 = vadd.f32 %v1947, %v1777
    %v1949 = vadd.f32 %v1948, %v1785
    %v1950 = vadd.f32 %v1949, %v1793
    %v1951 = vadd.f32 %v1950, %v1801
    %v1952 = vadd.f32 %v1951, %v1809
    %v1953 = vadd.f32 %v1952, %v1817
    %v1954 = vadd.f32 %v1570, %v1578
    %v1955 = vadd.f32 %v1954, %v1586
    %v1956 = vadd.f32 %v1955, %v1594
    %v1957 = vadd.f32 %v1956, %v1602
    %v1958 = vadd.f32 %v1957, %v1610
    %v1959 = vadd.f32 %v1958, %v1618
    %v1960 = vadd.f32 %v1959, %v1626
    %v1961 = vadd.f32 %v1960, %v1634
    %v1962 = vadd.f32 %v1961, %v1642
    %v1963 = vadd.f32 %v1962, %v1650
    %v1964 = vadd.f32 %v1963, %v1658
    %v1965 = vadd.f32 %v1964, %v1666
    %v1966 = vadd.f32 %v1965, %v1674
    %v1967 = vadd.f32 %v1966, %v1682
    %v1968 = vadd.f32 %v1967, %v1690
    %v1969 = vadd.f32 %v1968, %v1698
    %v1970 = vadd.f32 %v1969, %v1706
    %v1971 = vadd.f32 %v1970, %v1714
    %v1972 = vadd.f32 %v1971, %v1722
    %v1973 = vadd.f32 %v1972, %v1730
    %v1974 = vadd.f32 %v1973, %v1738
    %v1975 = vadd.f32 %v1974, %v1746
    %v1976 = vadd.f32 %v1975, %v1754
    %v1977 = vadd.f32 %v1976, %v1762
    %v1978 = vadd.f32 %v1977, %v1770
    %v1979 = vadd.f32 %v1978, %v1778
    %v1980 = vadd.f32 %v1979, %v1786
    %v1981 = vadd.f32 %v1980, %v1794
    %v1982 = vadd.f32 %v1981, %v1802
    %v1983 = vadd.f32 %v1982, %v1810
    %v1984 = vadd.f32 %v1983, %v1818
    %v1985 = vadd.f32 %v1571, %v1579
    %v1986 = vadd.f32 %v1985, %v1587
    %v1987 = vadd.f32 %v1986, %v1595
    %v1988 = vadd.f32 %v1987, %v1603
    %v1989 = vadd.f32 %v1988, %v1611
    %v1990 = vadd.f32 %v1989, %v1619
    %v1991 = vadd.f32 %v1990, %v1627
    %v1992 = vadd.f32 %v1991, %v1635
    %v1993 = vadd.f32 %v1992, %v1643
    %v1994 = vadd.f32 %v1993, %v1651
    %v1995 = vadd.f32 %v1994, %v1659
    %v1996 = vadd.f32 %v1995, %v1667
    %v1997 = vadd.f32 %v1996, %v1675
    %v1998 = vadd.f32 %v1997, %v1683
    %v1999 = vadd.f32 %v1998, %v1691
    %v2000 = vadd.f32 %v1999, %v1699
    %v2001 = vadd.f32 %v2000, %v1707
    %v2002 = vadd.f32 %v2001, %v1715
    %v2003 = vadd.f32 %v2002, %v1723
    %v2004 = vadd.f32 %v2003, %v1731
    %v2005 = vadd.f32 %v2004, %v1739
    %v2006 = vadd.f32 %v2005, %v1747
    %v2007 = vadd.f32 %v2006, %v1755
    %v2008 = vadd.f32 %v2007, %v1763
    %v2009 = vadd.f32 %v2008, %v1771
    %v2010 = vadd.f32 %v2009, %v1779
    %v2011 = vadd.f32 %v2010, %v1787
    %v2012 = vadd.f32 %v2011, %v1795
    %v2013 = vadd.f32 %v2012, %v1803
    %v2014 = vadd.f32 %v2013, %v1811
    %v2015 = vadd.f32 %v2014, %v1819
    %v2016 = vadd.f32 %v1572, %v1580
    %v2017 = vadd.f32 %v2016, %v1588
    %v2018 = vadd.f32 %v2017, %v1596
    %v2019 = vadd.f32 %v2018, %v1604
    %v2020 = vadd.f32 %v2019, %v1612
    %v2021 = vadd.f32 %v2020, %v1620
    %v2022 = vadd.f32 %v2021, %v1628
    %v2023 = vadd.f32 %v2022, %v1636
    %v2024 = vadd.f32 %v2023, %v1644
    %v2025 = vadd.f32 %v2024, %v1652
    %v2026 = vadd.f32 %v2025, %v1660
    %v2027 = vadd.f32 %v2026, %v1668
    %v2028 = vadd.f32 %v2027, %v1676
    %v2029 = vadd.f32 %v2028, %v1684
    %v2030 = vadd.f32 %v2029, %v1692
    %v2031 = vadd.f32 %v2030, %v1700
    %v2032 = vadd.f32 %v2031, %v1708
    %v2033 = vadd.f32 %v2032, %v1716
    %v2034 = vadd.f32 %v2033, %v1724
    %v2035 = vadd.f32 %v2034, %v1732
    %v2036 = vadd.f32 %v2035, %v1740
    %v2037 = vadd.f32 %v2036, %v1748
    %v2038 = vadd.f32 %v2037, %v1756
    %v2039 = vadd.f32 %v2038, %v1764
    %v2040 = vadd.f32 %v2039, %v1772
    %v2041 = vadd.f32 %v2040, %v1780
    %v2042 = vadd.f32 %v2041, %v1788
    %v2043 = vadd.f32 %v2042, %v1796
    %v2044 = vadd.f32 %v2043, %v1804
    %v2045 = vadd.f32 %v2044, %v1812
    %v2046 = vadd.f32 %v2045, %v1820
    %v2047 = vadd.f32 %v1573, %v1581
    %v2048 = vadd.f32 %v2047, %v1589
    %v2049 = vadd.f32 %v2048, %v1597
    %v2050 = vadd.f32 %v2049, %v1605
    %v2051 = vadd.f32 %v2050, %v1613
    %v2052 = vadd.f32 %v2051, %v1621
    %v2053 = vadd.f32 %v2052, %v1629
    %v2054 = vadd.f32 %v2053, %v1637
    %v2055 = vadd.f32 %v2054, %v1645
    %v2056 = vadd.f32 %v2055, %v1653
    %v2057 = vadd.f32 %v2056, %v1661
    %v2058 = vadd.f32 %v2057, %v1669
    %v2059 = vadd.f32 %v2058, %v1677
    %v2060 = vadd.f32 %v2059, %v1685
    %v2061 = vadd.f32 %v2060, %v1693
    %v2062 = vadd.f32 %v2061, %v1701
    %v2063 = vadd.f32 %v2062, %v1709
    %v2064 = vadd.f32 %v2063, %v1717
    %v2065 = vadd.f32 %v2064, %v1725
    %v2066 = vadd.f32 %v2065, %v1733
    %v2067 = vadd.f32 %v2066, %v1741
    %v2068 = vadd.f32 %v2067, %v1749
    %v2069 = vadd.f32 %v2068, %v1757
    %v2070 = vadd.f32 %v2069, %v1765
    %v2071 = vadd.f32 %v2070, %v1773
    %v2072 = vadd.f32 %v2071, %v1781
    %v2073 = vadd.f32 %v2072, %v1789
    %v2074 = vadd.f32 %v2073, %v1797
    %v2075 = vadd.f32 %v2074, %v1805
    %v2076 = vadd.f32 %v2075, %v1813
    %v2077 = vadd.f32 %v2076, %v1821
    %v2078 = vadd.f32 %v1822, %v1860
    %v2079 = vadd.f32 %v1823, %v1891
    %v2080 = vadd.f32 %v1824, %v1922
    %v2081 = vadd.f32 %v1825, %v1953
    %v2082 = vadd.f32 %v1826, %v1984
    %v2083 = vadd.f32 %v1827, %v2015
    %v2084 = vadd.f32 %v1828, %v2046
    %v2085 = vadd.f32 %v1829, %v2077
    %2086 = vst [vmem:[#allocation2] sm:$0xff] %v2078
    %2087 = vst [vmem:[#allocation2 + $0x8] sm:$0xff] %v2079
    %2088 = vst [vmem:[#allocation2 + $0x10] sm:$0xff] %v2080
    %2089 = vst [vmem:[#allocation2 + $0x18] sm:$0xff] %v2081
    %2090 = vst [vmem:[#allocation2 + $0x20] sm:$0xff] %v2082
    %2091 = vst [vmem:[#allocation2 + $0x28] sm:$0xff] %v2083
    %2092 = vst [vmem:[#allocation2 + $0x30] sm:$0xff] %v2084
    %2093 = vst [vmem:[#allocation2 + $0x38] sm:$0xff] %v2085
    // Predicated region
    $region18: #{tpu_custom_call.1} parent=1 // pred_check
      %p2094 = pneg %p15
    $region19: #{tpu_custom_call.1} parent=1 // pred_check_branch
      %2096 = sbr.rel (%p2094) target = $region21
    $region20: #{tpu_custom_call.1} parent=1 // pred_region
      %v2097 = vld [vmem:[#allocation2] sm:$0xff]
      %v2098 = vld [vmem:[#allocation2 + $0x8] sm:$0xff]
      %v2099 = vld [vmem:[#allocation2 + $0x10] sm:$0xff]
      %v2100 = vld [vmem:[#allocation2 + $0x18] sm:$0xff]
      %v2101 = vld [vmem:[#allocation2 + $0x20] sm:$0xff]
      %v2102 = vld [vmem:[#allocation2 + $0x28] sm:$0xff]
      %v2103 = vld [vmem:[#allocation2 + $0x30] sm:$0xff]
      %v2104 = vld [vmem:[#allocation2 + $0x38] sm:$0xff]
      %2105 = vst [vmem:[#allocation3] sm:$0xff] %v2097
      %2106 = vst [vmem:[#allocation3 + $0x8] sm:$0xff] %v2098
      %2107 = vst [vmem:[#allocation3 + $0x10] sm:$0xff] %v2099
      %2108 = vst [vmem:[#allocation3 + $0x18] sm:$0xff] %v2100
      %2109 = vst [vmem:[#allocation3 + $0x20] sm:$0xff] %v2101
      %2110 = vst [vmem:[#allocation3 + $0x28] sm:$0xff] %v2102
      %2111 = vst [vmem:[#allocation3 + $0x30] sm:$0xff] %v2103
      %2112 = vst [vmem:[#allocation3 + $0x38] sm:$0xff] %v2104
    $region21: #{tpu_custom_call.1} parent=1 // pred_fallthru
      _
    // Predicated region
    $region22: #{tpu_custom_call.1} parent=1 // pred_check
      _
    $region23: #{tpu_custom_call.1} parent=1 // pred_check_branch
      %2114 = sbr.rel (0) target = $region25
    $region24: #{tpu_custom_call.1} parent=1 // pred_region
      %2116 = vsyncadd [#allocation4], 0
      %s2117 = sshll.u32 [#allocation3], 4
      %s2118 = int_to_ptr.vmem [resolvable:$true] %s2117
      %s2119 = sshll.u32 %s3, 4
      %s2120 = int_to_ptr.hbm [resolvable:$true] %s2119
      %2125 = dma.vmem_to_hbm [thread:$0]  %s2118, 1024, %s2120, [#allocation4], 256, 256, 16
    $region25: #{tpu_custom_call.1} parent=1 // pred_fallthru
      _
    // Predicated region
    $region26: #{tpu_custom_call.1} parent=1 // pred_check
      _
    $region27: #{tpu_custom_call.1} parent=1 // pred_check_branch
      %2127 = sbr.rel (0) target = $region29
    $region28: #{tpu_custom_call.1} parent=1 // pred_region
      %2129 = dma.done [#allocation4], 1024
    $region29: #{tpu_custom_call.1} parent=1 // pred_fallthru
      _
    %2130 = vsyncpa [#allocation4], 1

</llo_original>
